<compile_context>
chip_gen: v5e
topology: v5e:2x2
jax: 0.10.0
libtpu: 0.0.40
codegen_flags: <defaults>
</compile_context>

<pallas_src>
import numpy as np

import jax
import jax.numpy as jnp
from jax import lax
from jax.experimental import pallas as pl
from jax.experimental.pallas import tpu as pltpu


# ------------------------- Pallas kernels -------------------------

def _prelu(v, a):
    return jnp.where(v >= 0, v, a * v)


def _gemm_bias_prelu_kernel(x_ref, w_ref, b_ref, a_ref, o_ref):
    # o = PReLU(w @ x + b); bf16 MXU operands, f32 accumulate.
    acc = jnp.dot(w_ref[...], x_ref[...], preferred_element_type=jnp.float32)
    o_ref[...] = _prelu(acc + b_ref[...], a_ref[0]).astype(o_ref.dtype)


def _gemm_bias_prelu_sub_kernel(x_ref, w_ref, b_ref, a_ref, e_ref, o_ref):
    # o = PReLU(w @ x + b) - e    (fused residual subtract: l0 - out_la)
    acc = jnp.dot(w_ref[...], x_ref[...], preferred_element_type=jnp.float32)
    o_ref[...] = (_prelu(acc + b_ref[...], a_ref[0]) - e_ref[...]).astype(o_ref.dtype)


def _gemm_bias_prelu_add_kernel(x_ref, w_ref, b_ref, a_ref, e_ref, o_ref):
    # o = PReLU(w @ x + b) + e    (fused residual add: h1 + h0, in phase layout)
    acc = jnp.dot(w_ref[...], x_ref[...], preferred_element_type=jnp.float32)
    o_ref[...] = (_prelu(acc + b_ref[...], a_ref[0]) + e_ref[...]).astype(o_ref.dtype)


def _down_fused_kernel(x_ref, w1_ref, b1_ref, a1_ref, w2_ref, b2_ref, a2_ref, o_ref):
    # o = PReLU(w2 @ PReLU(w1 @ x + b1) + b2)    (down1 + 1x1 conv1 fused)
    acc = jnp.dot(w1_ref[...], x_ref[...], preferred_element_type=jnp.float32)
    h = _prelu(acc + b1_ref[...], a1_ref[0])
    acc2 = jnp.dot(w2_ref[...], h.astype(jnp.bfloat16),
                   preferred_element_type=jnp.float32)
    o_ref[...] = _prelu(acc2 + b2_ref[...], a2_ref[0]).astype(o_ref.dtype)


def _combine_kernel(x_ref, l_ref, o_ref):
    # out_la = x + 0.1 * relu(x - l00) * x     (f32 elementwise, lane-dense tiles)
    xv = x_ref[...]
    act = jnp.maximum(xv - l_ref[...], 0.0)
    o_ref[...] = xv + 0.1 * (act * xv)


# ------------------------- tiling helpers -------------------------

_SMEM_SPEC = pl.BlockSpec(memory_space=pltpu.MemorySpace.SMEM)

_NUM_TC = None


def _tc_count():
    """Best-effort TensorCore count per chip (v5e/v6e: 1, v7x: 2). Safe fallback = 1."""
    global _NUM_TC
    if _NUM_TC is not None:
        return _NUM_TC
    n = 1
    for probe in (lambda: pltpu.get_tpu_info(), lambda: jax.devices()[0]):
        try:
            obj = probe()
        except Exception:
            continue
        for name in ("num_cores", "core_count", "tensorcore_count", "num_tensorcores"):
            v = getattr(obj, name, None)
            if isinstance(v, (int, np.integer)) and 0 < int(v) <= 8:
                n = max(n, int(v))
    _NUM_TC = n
    return n


def _ceil_to(x, m):
    return ((x + m - 1) // m) * m


def _pick_lane_tile(mp, r):
    """Lane tile: as large as possible (HBM-roofline friendly, fewer grid steps) but the
    (r, tn) f32 acc/output block capped at ~128 KiB so the epilogue stays in registers.
    Only split into multiple grid steps when there is >1 TensorCore to feed (v7x)."""
    cap = (128 * 1024) // (4 * max(int(r), 1))
    cap = max(128, min(1024, (cap // 128) * 128))
    tn = max(128, (min(cap, mp) // 128) * 128)
    while tn > 128 and mp % tn:
        tn -= 128
    nc = _tc_count()
    if nc > 1 and mp // tn < nc and mp >= nc * 128:
        t2 = (mp // nc // 128) * 128
        while t2 > 128 and mp % t2:
            t2 -= 128
        if t2 >= 128 and mp % t2 == 0:
            tn = min(tn, t2)
    return tn


def _pad_lanes(a, mp):
    if a.shape[-1] != mp:
        a = jnp.pad(a, ((0, 0), (0, mp - a.shape[-1])))
    return a


# ------------------------- Pallas wrappers -------------------------

def pallas_gemm_bias_prelu(col, w, b, alpha, extra=None, mode=None,
                           out_dtype=jnp.float32):
    """out(R, M) = PReLU(w @ col + b) [- extra | + extra], tiled over lanes.

    col: (K, M) bf16   w: (R, K) bf16   b: (R, 1) f32   alpha: (1,) f32 in SMEM
    extra: optional (R, M) f32 fused into the epilogue.
    """
    K, M = col.shape
    R = w.shape[0]
    mp = _ceil_to(M, 128)
    tn = _pick_lane_tile(mp, R)
    args = [_pad_lanes(col, mp), w, b, alpha]
    in_specs = [pl.BlockSpec((K, tn), lambda i: (0, i)),
                pl.BlockSpec((R, K), lambda i: (0, 0)),
                pl.BlockSpec((R, 1), lambda i: (0, 0)),
                _SMEM_SPEC]
    if mode is None:
        kernel = _gemm_bias_prelu_kernel
    else:
        kernel = (_gemm_bias_prelu_sub_kernel if mode == "sub"
                  else _gemm_bias_prelu_add_kernel)
        args.append(_pad_lanes(extra, mp))
        in_specs.append(pl.BlockSpec((R, tn), lambda i: (0, i)))
    out = pl.pallas_call(
        kernel,
        out_shape=jax.ShapeDtypeStruct((R, mp), out_dtype),
        grid=(mp // tn,),
        in_specs=in_specs,
        out_specs=pl.BlockSpec((R, tn), lambda i: (0, i)),
        compiler_params=pltpu.CompilerParams(dimension_semantics=("parallel",)),
    )(*args)
    return out[:, :M] if mp != M else out


def pallas_down_fused(col, w1, b1, a1, w2, b2, a2):
    """PReLU(w2 @ PReLU(w1 @ col + b1) + b2) -- down1 + conv1(1x1) fused."""
    K, M = col.shape
    R = w1.shape[0]
    mp = _ceil_to(M, 128)
    tn = _pick_lane_tile(mp, R)
    out = pl.pallas_call(
        _down_fused_kernel,
        out_shape=jax.ShapeDtypeStruct((R, mp), jnp.float32),
        grid=(mp // tn,),
        in_specs=[pl.BlockSpec((K, tn), lambda i: (0, i)),
                  pl.BlockSpec((R, K), lambda i: (0, 0)),
                  pl.BlockSpec((R, 1), lambda i: (0, 0)),
                  _SMEM_SPEC,
                  pl.BlockSpec((R, R), lambda i: (0, 0)),
                  pl.BlockSpec((R, 1), lambda i: (0, 0)),
                  _SMEM_SPEC],
        out_specs=pl.BlockSpec((R, tn), lambda i: (0, i)),
        compiler_params=pltpu.CompilerParams(dimension_semantics=("parallel",)),
    )(_pad_lanes(col, mp), w1, b1, a1, w2, b2, a2)
    return out[:, :M] if mp != M else out


def pallas_combine(x_ct, l_ct):
    """out_la = x + 0.1 * relu(x - l00) * x on the (C, M) channel-major layout."""
    C, M = x_ct.shape
    mp = _ceil_to(M, 128)
    tn = _pick_lane_tile(mp, C)
    out = pl.pallas_call(
        _combine_kernel,
        out_shape=jax.ShapeDtypeStruct((C, mp), jnp.float32),
        grid=(mp // tn,),
        in_specs=[pl.BlockSpec((C, tn), lambda i: (0, i)),
                  pl.BlockSpec((C, tn), lambda i: (0, i))],
        out_specs=pl.BlockSpec((C, tn), lambda i: (0, i)),
        compiler_params=pltpu.CompilerParams(dimension_semantics=("parallel",)),
    )(_pad_lanes(x_ct, mp), _pad_lanes(l_ct, mp))
    return out[:, :M] if mp != M else out


# ------------------------- layout glue (plain JAX) -------------------------

def im2col_ct(x_cf, k, s, p):
    """Channel-major im2col.  x_cf: (C, N, H, W) -> (C*k*k, N*Ho*Wo) bf16.

    Row order (c, ky, kx); lane order (n, ho, wo).
    TODO(synk): fold this into the GEMM kernels (in-kernel tap accumulation) to avoid
    materializing the k*k-expanded matrix in HBM.
    """
    C, N, H, W = x_cf.shape
    x_cf = x_cf.astype(jnp.bfloat16)
    if p:
        x_cf = jnp.pad(x_cf, ((0, 0), (0, 0), (p, p), (p, p)))
    Ho = (H + 2 * p - k) // s + 1
    Wo = (W + 2 * p - k) // s + 1
    taps = []
    for ky in range(k):
        for kx in range(k):
            taps.append(lax.slice(
                x_cf, (0, 0, ky, kx),
                (C, N, ky + s * (Ho - 1) + 1, kx + s * (Wo - 1) + 1),
                (1, 1, s, s)))
    col = jnp.stack(taps, axis=1)                       # (C, k*k, N, Ho, Wo)
    return col.reshape(C * k * k, N * Ho * Wo), Ho, Wo


def phase_to_space(y_ph, C, N, Hin, Win, s=4):
    """(C*s*s, N*Hin*Win) phase layout -> (C, N, s*Hin, s*Win) spatial."""
    y = y_ph.reshape(C, s, s, N, Hin, Win)
    y = y.transpose(0, 3, 4, 1, 5, 2)                   # (C, N, Hin, s, Win, s)
    return y.reshape(C, N, Hin * s, Win * s)


# ------------------------- FeedbackBlock2 forward -------------------------

def feedback_block2(x_nchw, PP):
    """x_nchw: (N, Cin, H, W), H and W multiples of 16.  Returns (N, nf, H, W)."""
    N, _, H, W = x_nchw.shape
    assert H % 16 == 0 and W % 16 == 0
    C = PP["down1"][0].shape[0]                          # num_filter

    # ---- down1 (k8 s4 p2) + conv1 (1x1), fused into a single Pallas call ----
    x_cf = jnp.transpose(x_nchw, (1, 0, 2, 3))           # (Cin, N, H, W)
    col1, Ho, Wo = im2col_ct(x_cf, 8, 4, 2)
    M = N * Ho * Wo
    w1, b1, a1 = PP["down1"]
    w2, b2, a2 = PP["conv1"]
    x_ct = pallas_down_fused(col1, w1, b1, a1, w2, b2, a2)          # (C, M) f32

    # ---- avgpool 4x4 ----
    # TODO(synk): tiny 4x4/4 average pool kept as XLA reshape+mean glue.
    p1 = x_ct.reshape(C, N, Ho // 4, 4, Wo // 4, 4).mean(axis=(3, 5))

    # ---- up_1 deconv -> l00; out_la = x + 0.1*relu(x - l00)*x ----
    wd, bd, ad = PP["up_1"]
    col_p1, _, _ = im2col_ct(p1, 3, 1, 1)
    l00_ph = pallas_gemm_bias_prelu(col_p1, wd, bd, ad)             # (C*16, N*(Ho/4)*(Wo/4))
    l00 = phase_to_space(l00_ph, C, N, Ho // 4, Wo // 4).reshape(C, M)
    out_la = pallas_combine(x_ct, l00)                              # (C, M)

    # ---- up_conv1 deconv -> h0, kept in phase layout end-to-end ----
    wd, bd, ad = PP["up_conv1"]
    col_la, _, _ = im2col_ct(out_la.reshape(C, N, Ho, Wo), 3, 1, 1)
    h0_ph = pallas_gemm_bias_prelu(col_la, wd, bd, ad)              # (C*16, M) f32

    # ---- up_conv2 (k8 s4 p2) evaluated directly in phase space:
    #      a 3x3 s1 p1 conv over the C*16 phase channels at LOW resolution.
    #      (l0 - out_la) fused into the epilogue; diff emitted bf16 (its only
    #      consumer is the bf16 im2col of up_conv3).
    wc, bc, ac = PP["up_conv2"]
    col_h0p, _, _ = im2col_ct(h0_ph.reshape(C * 16, N, Ho, Wo), 3, 1, 1)
    diff = pallas_gemm_bias_prelu(col_h0p, wc, bc, ac, extra=out_la, mode="sub",
                                  out_dtype=jnp.bfloat16)           # (C, M) bf16

    # ---- up_conv3 deconv; (+ h0) fused into the epilogue in phase layout ----
    wd, bd, ad = PP["up_conv3"]
    col_df, _, _ = im2col_ct(diff.reshape(C, N, Ho, Wo), 3, 1, 1)
    out_ph = pallas_gemm_bias_prelu(col_df, wd, bd, ad, extra=h0_ph, mode="add")
    out_sp = phase_to_space(out_ph, C, N, Ho, Wo)                   # (C, N, H, W)
    return jnp.transpose(out_sp, (1, 0, 2, 3))                      # NCHW


# ------------------------- parameters -------------------------

def init_params(key, cin, nf):
    """Raw params in PyTorch layout: Conv2d (Cout,Cin,k,k), ConvTranspose2d (Cin,Cout,k,k)."""
    def mk(k, wshape, cout):
        kw, kb = jax.random.split(k)
        return (0.1 * jax.random.normal(kw, wshape, jnp.float32),
                0.1 * jax.random.normal(kb, (cout,), jnp.float32),
                jnp.float32(0.25))                      # torch.nn.PReLU() default
    ks = jax.random.split(key, 6)
    return {
        "down1":    mk(ks[0], (nf, cin, 8, 8), nf),
        "conv1":    mk(ks[1], (nf, nf, 1, 1), nf),
        "up_1":     mk(ks[2], (nf, nf, 8, 8), nf),
        "up_conv1": mk(ks[3], (nf, nf, 8, 8), nf),
        "up_conv2": mk(ks[4], (nf, nf, 8, 8), nf),
        "up_conv3": mk(ks[5], (nf, nf, 8, 8), nf),
    }


def _deconv_phase_weight(W, k=8, s=4, p=2):
    """ConvTranspose2d(k=8,s=4,p=2) == stride-1 3x3 conv emitting s*s phases per
    output channel (followed by depth-to-space).  Tap map: ky = phase + (p+s) - s*d."""
    assert W.shape[2] == k and W.shape[3] == k and (k, s, p) == (8, 4, 2)
    cin, cout = W.shape[0], W.shape[1]
    Wnp = np.asarray(W, np.float32)
    Wp = np.zeros((cout, s, s, cin, 3, 3), np.float32)
    for py in range(s):
        for dy in range(3):
            ky = py + 6 - 4 * dy
            if not 0 <= ky < k:
                continue
            for px in range(s):
                for dx in range(3):
                    kx = px + 6 - 4 * dx
                    if not 0 <= kx < k:
                        continue
                    Wp[:, py, px, :, dy, dx] = Wnp[:, :, ky, kx].T
    return jnp.asarray(Wp.reshape(cout * s * s, cin * 9), jnp.bfloat16)


def _phase_conv_weight(W, k=8, s=4, p=2):
    """Conv2d(k=8,s=4,p=2) applied to an activation stored as (Cin*s*s) sub-pixel
    phase channels at LOW resolution == 3x3 stride-1 pad-1 conv over the phase
    channels.  Tap map: ky = s*(dy-1) + phase + p."""
    assert W.shape[2] == k and W.shape[3] == k and (k, s, p) == (8, 4, 2)
    cout, cin = W.shape[0], W.shape[1]
    Wnp = np.asarray(W, np.float32)
    Wp = np.zeros((cout, cin, s, s, 3, 3), np.float32)
    for dy in range(3):
        for py in range(s):
            ky = 4 * (dy - 1) + py + 2
            if not 0 <= ky < k:
                continue
            for dx in range(3):
                for px in range(s):
                    kx = 4 * (dx - 1) + px + 2
                    if not 0 <= kx < k:
                        continue
                    Wp[:, :, py, px, dy, dx] = Wnp[:, :, ky, kx]
    return jnp.asarray(Wp.reshape(cout, cin * s * s * 9), jnp.bfloat16)


def _prep_conv(prm):
    W, b, a = prm
    cout = W.shape[0]
    return (jnp.asarray(W.reshape(cout, -1), jnp.bfloat16),
            b.reshape(cout, 1).astype(jnp.float32),
            jnp.asarray(a, jnp.float32).reshape(1))


def _prep_conv_phase(prm):
    W, b, a = prm
    cout = W.shape[0]
    return (_phase_conv_weight(W),
            b.reshape(cout, 1).astype(jnp.float32),
            jnp.asarray(a, jnp.float32).reshape(1))


def _prep_deconv(prm):
    W, b, a = prm
    cout = W.shape[1]
    return (_deconv_phase_weight(W),
            jnp.repeat(b, 16).reshape(cout * 16, 1).astype(jnp.float32),
            jnp.asarray(a, jnp.float32).reshape(1))


def prepare_params(P):
    """One-time weight massaging (hoisted out of the forward)."""
    return {
        "down1":    _prep_conv(P["down1"]),
        "conv1":    _prep_conv(P["conv1"]),
        "up_1":     _prep_deconv(P["up_1"]),
        "up_conv1": _prep_deconv(P["up_conv1"]),
        "up_conv2": _prep_conv_phase(P["up_conv2"]),
        "up_conv3": _prep_deconv(P["up_conv3"]),
    }


# ------------------------- pure-JAX reference (for verification) -----------

def ref_forward(x, P):
    # Matches the kernel's numerics: bf16 conv operands, f32 accumulation,
    # f32 elementwise / bias / PReLU.  (Expect slightly larger deviation vs a
    # pure-f32 PyTorch baseline due to bf16 MXU operands.)
    def prelu(v, a):
        return jnp.where(v >= 0, v, a * v)

    def conv(x, prm, s, p):
        W, b, a = prm
        out = lax.conv_general_dilated(
            x.astype(jnp.bfloat16), W.astype(jnp.bfloat16), (s, s),
            [(p, p), (p, p)], dimension_numbers=("NCHW", "OIHW", "NCHW"),
            preferred_element_type=jnp.float32)
        return prelu(out + b.reshape(1, -1, 1, 1), a)

    def deconv(x, prm, k, s, p):
        W, b, a = prm
        wc = jnp.flip(W, (2, 3)).transpose(1, 0, 2, 3)
        out = lax.conv_general_dilated(
            x.astype(jnp.bfloat16), wc.astype(jnp.bfloat16), (1, 1),
            [(k - 1 - p, k - 1 - p)] * 2, lhs_dilation=(s, s),
            dimension_numbers=("NCHW", "OIHW", "NCHW"),
            preferred_element_type=jnp.float32)
        return prelu(out + b.reshape(1, -1, 1, 1), a)

    x = conv(x, P["down1"], 4, 2)
    x = conv(x, P["conv1"], 1, 0)
    N, C, H, W = x.shape
    p1 = x.reshape(N, C, H // 4, 4, W // 4, 4).mean(axis=(3, 5))
    l00 = deconv(p1, P["up_1"], 8, 4, 2)
    out_la = x + 0.1 * (jnp.maximum(x - l00, 0.0) * x)
    h0 = deconv(out_la, P["up_conv1"], 8, 4, 2)
    l0 = conv(h0, P["up_conv2"], 4, 2)
    h1 = deconv(l0 - out_la, P["up_conv3"], 8, 4, 2)
    return h1 + h0


# ------------------------- main -------------------------

if __name__ == "__main__":
    key = jax.random.PRNGKey(0)
    kx, kp = jax.random.split(key)

    N, Cin, Cf, H, W = 2, 4, 8, 32, 32          # H, W must be multiples of 16
    x = jax.random.normal(kx, (N, Cin, H, W), dtype=jnp.float32)
    P = init_params(kp, Cin, Cf)
    PP = prepare_params(P)

    fwd = jax.jit(feedback_block2)
    out = jax.block_until_ready(fwd(x, PP))
    ref = jax.block_until_ready(ref_forward(x, P))

    assert out.shape == (N, Cf, H, W), out.shape
    np.testing.assert_allclose(np.asarray(out), np.asarray(ref),
                               rtol=1e-2, atol=1e-2)
    print("KERNEL_OK")
</pallas_src>

<mosaic_0001>
module attributes {stable_mosaic.version = 11 : i64} {
  func.func @_down_fused_kernel(%arg0: i32, %arg1: memref<256x128xbf16, #tpu.memory_space<vmem>>, %arg2: memref<8x256xbf16, #tpu.memory_space<vmem>>, %arg3: memref<8x1xf32, #tpu.memory_space<vmem>>, %arg4: memref<1xf32, #tpu.memory_space<smem>>, %arg5: memref<8x8xbf16, #tpu.memory_space<vmem>>, %arg6: memref<8x1xf32, #tpu.memory_space<vmem>>, %arg7: memref<1xf32, #tpu.memory_space<smem>>, %arg8: memref<8x128xf32, #tpu.memory_space<vmem>>) attributes {dimension_semantics = [#tpu.dimension_semantics<parallel>], iteration_bounds = array<i64: 1>, scalar_prefetch = 0 : i64, scratch_operands = 0 : i64, tpu.core_type = #tpu.core_type<tc>, window_params = [{transform_indices = @transform_0, window_bounds = array<i64: 256, 128>}, {pipeline_mode = #tpu.pipeline_mode<synchronous>, transform_indices = @transform_1, window_bounds = array<i64: 8, 256>}, {pipeline_mode = #tpu.pipeline_mode<synchronous>, transform_indices = @transform_2, window_bounds = array<i64: 8, 1>}, {transform_indices = @transform_3, window_bounds = array<i64: 1>}, {pipeline_mode = #tpu.pipeline_mode<synchronous>, transform_indices = @transform_4, window_bounds = array<i64: 8, 8>}, {pipeline_mode = #tpu.pipeline_mode<synchronous>, transform_indices = @transform_5, window_bounds = array<i64: 8, 1>}, {transform_indices = @transform_6, window_bounds = array<i64: 1>}, {transform_indices = @transform_7, window_bounds = array<i64: 8, 128>}]} {
    %c0 = arith.constant 0 : index
    %c0_0 = arith.constant 0 : index
    %0 = vector.load %arg2[%c0, %c0_0] : memref<8x256xbf16, #tpu.memory_space<vmem>>, vector<8x256xbf16>
    %c0_1 = arith.constant 0 : index
    %c0_2 = arith.constant 0 : index
    %1 = vector.load %arg1[%c0_1, %c0_2] : memref<256x128xbf16, #tpu.memory_space<vmem>>, vector<256x128xbf16>
    %cst = arith.constant dense<0.000000e+00> : vector<8x128xf32>
    %2 = tpu.matmul %0, %1, %cst {dimension_numbers = #tpu.dot_dimension_numbers<[1], [0], [0], [1], [0, 0, 1, 1], [], []>} : vector<8x256xbf16>, vector<256x128xbf16>, vector<8x128xf32> -> vector<8x128xf32>
    %c0_3 = arith.constant 0 : index
    %c0_4 = arith.constant 0 : index
    %3 = vector.load %arg3[%c0_3, %c0_4] : memref<8x1xf32, #tpu.memory_space<vmem>>, vector<8x1xf32>
    %4 = vector.broadcast %3 : vector<8x1xf32> to vector<8x128xf32>
    %5 = arith.addf %2, %4 : vector<8x128xf32>
    %c0_5 = arith.constant 0 : index
    %6 = memref.load %arg4[%c0_5] : memref<1xf32, #tpu.memory_space<smem>>
    %cst_6 = arith.constant 0.000000e+00 : f32
    %7 = vector.broadcast %cst_6 : f32 to vector<8x128xf32>
    %8 = arith.cmpf oge, %5, %7 : vector<8x128xf32>
    %9 = vector.broadcast %6 : f32 to vector<8x128xf32>
    %10 = arith.mulf %9, %5 : vector<8x128xf32>
    %11 = arith.select %8, %5, %10 : vector<8x128xi1>, vector<8x128xf32>
    %c0_7 = arith.constant 0 : index
    %c0_8 = arith.constant 0 : index
    %12 = vector.load %arg5[%c0_7, %c0_8] : memref<8x8xbf16, #tpu.memory_space<vmem>>, vector<8x8xbf16>
    %13 = arith.truncf %11 : vector<8x128xf32> to vector<8x128xbf16>
    %cst_9 = arith.constant dense<0.000000e+00> : vector<8x128xf32>
    %14 = tpu.matmul %12, %13, %cst_9 {dimension_numbers = #tpu.dot_dimension_numbers<[1], [0], [0], [1], [0, 0, 1, 1], [], []>} : vector<8x8xbf16>, vector<8x128xbf16>, vector<8x128xf32> -> vector<8x128xf32>
    %c0_10 = arith.constant 0 : index
    %c0_11 = arith.constant 0 : index
    %15 = vector.load %arg6[%c0_10, %c0_11] : memref<8x1xf32, #tpu.memory_space<vmem>>, vector<8x1xf32>
    %16 = vector.broadcast %15 : vector<8x1xf32> to vector<8x128xf32>
    %17 = arith.addf %14, %16 : vector<8x128xf32>
    %c0_12 = arith.constant 0 : index
    %18 = memref.load %arg7[%c0_12] : memref<1xf32, #tpu.memory_space<smem>>
    %cst_13 = arith.constant 0.000000e+00 : f32
    %19 = vector.broadcast %cst_13 : f32 to vector<8x128xf32>
    %20 = arith.cmpf oge, %17, %19 : vector<8x128xf32>
    %21 = vector.broadcast %18 : f32 to vector<8x128xf32>
    %22 = arith.mulf %21, %17 : vector<8x128xf32>
    %23 = arith.select %20, %17, %22 : vector<8x128xi1>, vector<8x128xf32>
    %c0_14 = arith.constant 0 : index
    %c0_15 = arith.constant 0 : index
    %24 = vector.load %arg8[%c0_14, %c0_15] : memref<8x128xf32, #tpu.memory_space<vmem>>, vector<8x128xf32>
    tpu.vector_store %arg8[%c0_14, %c0_15], %23 {strides = array<i32>} : memref<8x128xf32, #tpu.memory_space<vmem>>, vector<8x128xf32>,
    return
  }
  func.func @transform_0(%arg0: i32) -> (i32, i32) {
    %c0_i32 = arith.constant 0 : i32
    %c0_i32_0 = arith.constant 0 : i32
    return %c0_i32, %arg0 : i32, i32
  }
  func.func @transform_1(%arg0: i32) -> (i32, i32) {
    %c0_i32 = arith.constant 0 : i32
    %c0_i32_0 = arith.constant 0 : i32
    %c0_i32_1 = arith.constant 0 : i32
    return %c0_i32, %c0_i32_0 : i32, i32
  }
  func.func @transform_2(%arg0: i32) -> (i32, i32) {
    %c0_i32 = arith.constant 0 : i32
    %c0_i32_0 = arith.constant 0 : i32
    %c0_i32_1 = arith.constant 0 : i32
    return %c0_i32, %c0_i32_0 : i32, i32
  }
  func.func @transform_3(%arg0: i32) -> i32 {
    %c0_i32 = arith.constant 0 : i32
    %c0_i32_0 = arith.constant 0 : i32
    return %c0_i32 : i32
  }
  func.func @transform_4(%arg0: i32) -> (i32, i32) {
    %c0_i32 = arith.constant 0 : i32
    %c0_i32_0 = arith.constant 0 : i32
    %c0_i32_1 = arith.constant 0 : i32
    return %c0_i32, %c0_i32_0 : i32, i32
  }
  func.func @transform_5(%arg0: i32) -> (i32, i32) {
    %c0_i32 = arith.constant 0 : i32
    %c0_i32_0 = arith.constant 0 : i32
    %c0_i32_1 = arith.constant 0 : i32
    return %c0_i32, %c0_i32_0 : i32, i32
  }
  func.func @transform_6(%arg0: i32) -> i32 {
    %c0_i32 = arith.constant 0 : i32
    %c0_i32_0 = arith.constant 0 : i32
    return %c0_i32 : i32
  }
  func.func @transform_7(%arg0: i32) -> (i32, i32) {
    %c0_i32 = arith.constant 0 : i32
    %c0_i32_0 = arith.constant 0 : i32
    return %c0_i32, %arg0 : i32, i32
  }
}

module attributes {stable_mosaic.version = 11 : i64} {
  func.func @_gemm_bias_prelu_kernel(%arg0: i32, %arg1: memref<72x128xbf16, #tpu.memory_space<vmem>>, %arg2: memref<128x72xbf16, #tpu.memory_space<vmem>>, %arg3: memref<128x1xf32, #tpu.memory_space<vmem>>, %arg4: memref<1xf32, #tpu.memory_space<smem>>, %arg5: memref<128x128xf32, #tpu.memory_space<vmem>>) attributes {dimension_semantics = [#tpu.dimension_semantics<parallel>], iteration_bounds = array<i64: 1>, scalar_prefetch = 0 : i64, scratch_operands = 0 : i64, tpu.core_type = #tpu.core_type<tc>, window_params = [{transform_indices = @transform_0, window_bounds = array<i64: 72, 128>}, {pipeline_mode = #tpu.pipeline_mode<synchronous>, transform_indices = @transform_1, window_bounds = array<i64: 128, 72>}, {pipeline_mode = #tpu.pipeline_mode<synchronous>, transform_indices = @transform_2, window_bounds = array<i64: 128, 1>}, {transform_indices = @transform_3, window_bounds = array<i64: 1>}, {transform_indices = @transform_4, window_bounds = array<i64: 128, 128>}]} {
    %c0 = arith.constant 0 : index
    %c0_0 = arith.constant 0 : index
    %0 = vector.load %arg2[%c0, %c0_0] : memref<128x72xbf16, #tpu.memory_space<vmem>>, vector<128x72xbf16>
    %c0_1 = arith.constant 0 : index
    %c0_2 = arith.constant 0 : index
    %1 = vector.load %arg1[%c0_1, %c0_2] : memref<72x128xbf16, #tpu.memory_space<vmem>>, vector<72x128xbf16>
    %cst = arith.constant dense<0.000000e+00> : vector<128x128xf32>
    %2 = tpu.matmul %0, %1, %cst {dimension_numbers = #tpu.dot_dimension_numbers<[1], [0], [0], [1], [0, 0, 1, 1], [], []>} : vector<128x72xbf16>, vector<72x128xbf16>, vector<128x128xf32> -> vector<128x128xf32>
    %c0_3 = arith.constant 0 : index
    %c0_4 = arith.constant 0 : index
    %3 = vector.load %arg3[%c0_3, %c0_4] : memref<128x1xf32, #tpu.memory_space<vmem>>, vector<128x1xf32>
    %4 = vector.broadcast %3 : vector<128x1xf32> to vector<128x128xf32>
    %5 = arith.addf %2, %4 : vector<128x128xf32>
    %c0_5 = arith.constant 0 : index
    %6 = memref.load %arg4[%c0_5] : memref<1xf32, #tpu.memory_space<smem>>
    %cst_6 = arith.constant 0.000000e+00 : f32
    %7 = vector.broadcast %cst_6 : f32 to vector<128x128xf32>
    %8 = arith.cmpf oge, %5, %7 : vector<128x128xf32>
    %9 = vector.broadcast %6 : f32 to vector<128x128xf32>
    %10 = arith.mulf %9, %5 : vector<128x128xf32>
    %11 = arith.select %8, %5, %10 : vector<128x128xi1>, vector<128x128xf32>
    %c0_7 = arith.constant 0 : index
    %c0_8 = arith.constant 0 : index
    %12 = vector.load %arg5[%c0_7, %c0_8] : memref<128x128xf32, #tpu.memory_space<vmem>>, vector<128x128xf32>
    tpu.vector_store %arg5[%c0_7, %c0_8], %11 {strides = array<i32>} : memref<128x128xf32, #tpu.memory_space<vmem>>, vector<128x128xf32>,
    return
  }
  func.func @transform_0(%arg0: i32) -> (i32, i32) {
    %c0_i32 = arith.constant 0 : i32
    %c0_i32_0 = arith.constant 0 : i32
    return %c0_i32, %arg0 : i32, i32
  }
  func.func @transform_1(%arg0: i32) -> (i32, i32) {
    %c0_i32 = arith.constant 0 : i32
    %c0_i32_0 = arith.constant 0 : i32
    %c0_i32_1 = arith.constant 0 : i32
    return %c0_i32, %c0_i32_0 : i32, i32
  }
  func.func @transform_2(%arg0: i32) -> (i32, i32) {
    %c0_i32 = arith.constant 0 : i32
    %c0_i32_0 = arith.constant 0 : i32
    %c0_i32_1 = arith.constant 0 : i32
    return %c0_i32, %c0_i32_0 : i32, i32
  }
  func.func @transform_3(%arg0: i32) -> i32 {
    %c0_i32 = arith.constant 0 : i32
    %c0_i32_0 = arith.constant 0 : i32
    return %c0_i32 : i32
  }
  func.func @transform_4(%arg0: i32) -> (i32, i32) {
    %c0_i32 = arith.constant 0 : i32
    %c0_i32_0 = arith.constant 0 : i32
    return %c0_i32, %arg0 : i32, i32
  }
}

module attributes {stable_mosaic.version = 11 : i64} {
  func.func @_combine_kernel(%arg0: i32, %arg1: memref<8x128xf32, #tpu.memory_space<vmem>>, %arg2: memref<8x128xf32, #tpu.memory_space<vmem>>, %arg3: memref<8x128xf32, #tpu.memory_space<vmem>>) attributes {dimension_semantics = [#tpu.dimension_semantics<parallel>], iteration_bounds = array<i64: 1>, scalar_prefetch = 0 : i64, scratch_operands = 0 : i64, tpu.core_type = #tpu.core_type<tc>, window_params = [{transform_indices = @transform_0, window_bounds = array<i64: 8, 128>}, {transform_indices = @transform_1, window_bounds = array<i64: 8, 128>}, {transform_indices = @transform_2, window_bounds = array<i64: 8, 128>}]} {
    %c0 = arith.constant 0 : index
    %c0_0 = arith.constant 0 : index
    %0 = vector.load %arg1[%c0, %c0_0] : memref<8x128xf32, #tpu.memory_space<vmem>>, vector<8x128xf32>
    %c0_1 = arith.constant 0 : index
    %c0_2 = arith.constant 0 : index
    %1 = vector.load %arg2[%c0_1, %c0_2] : memref<8x128xf32, #tpu.memory_space<vmem>>, vector<8x128xf32>
    %2 = arith.subf %0, %1 : vector<8x128xf32>
    %cst = arith.constant 0.000000e+00 : f32
    %3 = vector.broadcast %cst : f32 to vector<8x128xf32>
    %4 = arith.maximumf %2, %3 : vector<8x128xf32>
    %5 = arith.mulf %4, %0 : vector<8x128xf32>
    %cst_3 = arith.constant 1.000000e-01 : f32
    %6 = vector.broadcast %cst_3 : f32 to vector<8x128xf32>
    %7 = arith.mulf %6, %5 : vector<8x128xf32>
    %8 = arith.addf %0, %7 : vector<8x128xf32>
    %c0_4 = arith.constant 0 : index
    %c0_5 = arith.constant 0 : index
    %9 = vector.load %arg3[%c0_4, %c0_5] : memref<8x128xf32, #tpu.memory_space<vmem>>, vector<8x128xf32>
    tpu.vector_store %arg3[%c0_4, %c0_5], %8 {strides = array<i32>} : memref<8x128xf32, #tpu.memory_space<vmem>>, vector<8x128xf32>,
    return
  }
  func.func @transform_0(%arg0: i32) -> (i32, i32) {
    %c0_i32 = arith.constant 0 : i32
    %c0_i32_0 = arith.constant 0 : i32
    return %c0_i32, %arg0 : i32, i32
  }
  func.func @transform_1(%arg0: i32) -> (i32, i32) {
    %c0_i32 = arith.constant 0 : i32
    %c0_i32_0 = arith.constant 0 : i32
    return %c0_i32, %arg0 : i32, i32
  }
  func.func @transform_2(%arg0: i32) -> (i32, i32) {
    %c0_i32 = arith.constant 0 : i32
    %c0_i32_0 = arith.constant 0 : i32
    return %c0_i32, %arg0 : i32, i32
  }
}

module attributes {stable_mosaic.version = 11 : i64} {
  func.func @_gemm_bias_prelu_sub_kernel(%arg0: i32, %arg1: memref<1152x128xbf16, #tpu.memory_space<vmem>>, %arg2: memref<8x1152xbf16, #tpu.memory_space<vmem>>, %arg3: memref<8x1xf32, #tpu.memory_space<vmem>>, %arg4: memref<1xf32, #tpu.memory_space<smem>>, %arg5: memref<8x128xf32, #tpu.memory_space<vmem>>, %arg6: memref<8x128xbf16, #tpu.memory_space<vmem>>) attributes {dimension_semantics = [#tpu.dimension_semantics<parallel>], iteration_bounds = array<i64: 1>, scalar_prefetch = 0 : i64, scratch_operands = 0 : i64, tpu.core_type = #tpu.core_type<tc>, window_params = [{transform_indices = @transform_0, window_bounds = array<i64: 1152, 128>}, {pipeline_mode = #tpu.pipeline_mode<synchronous>, transform_indices = @transform_1, window_bounds = array<i64: 8, 1152>}, {pipeline_mode = #tpu.pipeline_mode<synchronous>, transform_indices = @transform_2, window_bounds = array<i64: 8, 1>}, {transform_indices = @transform_3, window_bounds = array<i64: 1>}, {transform_indices = @transform_4, window_bounds = array<i64: 8, 128>}, {transform_indices = @transform_5, window_bounds = array<i64: 8, 128>}]} {
    %c0 = arith.constant 0 : index
    %c0_0 = arith.constant 0 : index
    %0 = vector.load %arg2[%c0, %c0_0] : memref<8x1152xbf16, #tpu.memory_space<vmem>>, vector<8x1152xbf16>
    %c0_1 = arith.constant 0 : index
    %c0_2 = arith.constant 0 : index
    %1 = vector.load %arg1[%c0_1, %c0_2] : memref<1152x128xbf16, #tpu.memory_space<vmem>>, vector<1152x128xbf16>
    %cst = arith.constant dense<0.000000e+00> : vector<8x128xf32>
    %2 = tpu.matmul %0, %1, %cst {dimension_numbers = #tpu.dot_dimension_numbers<[1], [0], [0], [1], [0, 0, 1, 1], [], []>} : vector<8x1152xbf16>, vector<1152x128xbf16>, vector<8x128xf32> -> vector<8x128xf32>
    %c0_3 = arith.constant 0 : index
    %c0_4 = arith.constant 0 : index
    %3 = vector.load %arg3[%c0_3, %c0_4] : memref<8x1xf32, #tpu.memory_space<vmem>>, vector<8x1xf32>
    %4 = vector.broadcast %3 : vector<8x1xf32> to vector<8x128xf32>
    %5 = arith.addf %2, %4 : vector<8x128xf32>
    %c0_5 = arith.constant 0 : index
    %6 = memref.load %arg4[%c0_5] : memref<1xf32, #tpu.memory_space<smem>>
    %cst_6 = arith.constant 0.000000e+00 : f32
    %7 = vector.broadcast %cst_6 : f32 to vector<8x128xf32>
    %8 = arith.cmpf oge, %5, %7 : vector<8x128xf32>
    %9 = vector.broadcast %6 : f32 to vector<8x128xf32>
    %10 = arith.mulf %9, %5 : vector<8x128xf32>
    %11 = arith.select %8, %5, %10 : vector<8x128xi1>, vector<8x128xf32>
    %c0_7 = arith.constant 0 : index
    %c0_8 = arith.constant 0 : index
    %12 = vector.load %arg5[%c0_7, %c0_8] : memref<8x128xf32, #tpu.memory_space<vmem>>, vector<8x128xf32>
    %13 = arith.subf %11, %12 : vector<8x128xf32>
    %14 = arith.truncf %13 : vector<8x128xf32> to vector<8x128xbf16>
    %c0_9 = arith.constant 0 : index
    %c0_10 = arith.constant 0 : index
    %15 = vector.load %arg6[%c0_9, %c0_10] : memref<8x128xbf16, #tpu.memory_space<vmem>>, vector<8x128xbf16>
    tpu.vector_store %arg6[%c0_9, %c0_10], %14 {strides = array<i32>} : memref<8x128xbf16, #tpu.memory_space<vmem>>, vector<8x128xbf16>,
    return
  }
  func.func @transform_0(%arg0: i32) -> (i32, i32) {
    %c0_i32 = arith.constant 0 : i32
    %c0_i32_0 = arith.constant 0 : i32
    return %c0_i32, %arg0 : i32, i32
  }
  func.func @transform_1(%arg0: i32) -> (i32, i32) {
    %c0_i32 = arith.constant 0 : i32
    %c0_i32_0 = arith.constant 0 : i32
    %c0_i32_1 = arith.constant 0 : i32
    return %c0_i32, %c0_i32_0 : i32, i32
  }
  func.func @transform_2(%arg0: i32) -> (i32, i32) {
    %c0_i32 = arith.constant 0 : i32
    %c0_i32_0 = arith.constant 0 : i32
    %c0_i32_1 = arith.constant 0 : i32
    return %c0_i32, %c0_i32_0 : i32, i32
  }
  func.func @transform_3(%arg0: i32) -> i32 {
    %c0_i32 = arith.constant 0 : i32
    %c0_i32_0 = arith.constant 0 : i32
    return %c0_i32 : i32
  }
  func.func @transform_4(%arg0: i32) -> (i32, i32) {
    %c0_i32 = arith.constant 0 : i32
    %c0_i32_0 = arith.constant 0 : i32
    return %c0_i32, %arg0 : i32, i32
  }
  func.func @transform_5(%arg0: i32) -> (i32, i32) {
    %c0_i32 = arith.constant 0 : i32
    %c0_i32_0 = arith.constant 0 : i32
    return %c0_i32, %arg0 : i32, i32
  }
}

module attributes {stable_mosaic.version = 11 : i64} {
  func.func @_gemm_bias_prelu_add_kernel(%arg0: i32, %arg1: memref<72x128xbf16, #tpu.memory_space<vmem>>, %arg2: memref<128x72xbf16, #tpu.memory_space<vmem>>, %arg3: memref<128x1xf32, #tpu.memory_space<vmem>>, %arg4: memref<1xf32, #tpu.memory_space<smem>>, %arg5: memref<128x128xf32, #tpu.memory_space<vmem>>, %arg6: memref<128x128xf32, #tpu.memory_space<vmem>>) attributes {dimension_semantics = [#tpu.dimension_semantics<parallel>], iteration_bounds = array<i64: 1>, scalar_prefetch = 0 : i64, scratch_operands = 0 : i64, tpu.core_type = #tpu.core_type<tc>, window_params = [{transform_indices = @transform_0, window_bounds = array<i64: 72, 128>}, {pipeline_mode = #tpu.pipeline_mode<synchronous>, transform_indices = @transform_1, window_bounds = array<i64: 128, 72>}, {pipeline_mode = #tpu.pipeline_mode<synchronous>, transform_indices = @transform_2, window_bounds = array<i64: 128, 1>}, {transform_indices = @transform_3, window_bounds = array<i64: 1>}, {transform_indices = @transform_4, window_bounds = array<i64: 128, 128>}, {transform_indices = @transform_5, window_bounds = array<i64: 128, 128>}]} {
    %c0 = arith.constant 0 : index
    %c0_0 = arith.constant 0 : index
    %0 = vector.load %arg2[%c0, %c0_0] : memref<128x72xbf16, #tpu.memory_space<vmem>>, vector<128x72xbf16>
    %c0_1 = arith.constant 0 : index
    %c0_2 = arith.constant 0 : index
    %1 = vector.load %arg1[%c0_1, %c0_2] : memref<72x128xbf16, #tpu.memory_space<vmem>>, vector<72x128xbf16>
    %cst = arith.constant dense<0.000000e+00> : vector<128x128xf32>
    %2 = tpu.matmul %0, %1, %cst {dimension_numbers = #tpu.dot_dimension_numbers<[1], [0], [0], [1], [0, 0, 1, 1], [], []>} : vector<128x72xbf16>, vector<72x128xbf16>, vector<128x128xf32> -> vector<128x128xf32>
    %c0_3 = arith.constant 0 : index
    %c0_4 = arith.constant 0 : index
    %3 = vector.load %arg3[%c0_3, %c0_4] : memref<128x1xf32, #tpu.memory_space<vmem>>, vector<128x1xf32>
    %4 = vector.broadcast %3 : vector<128x1xf32> to vector<128x128xf32>
    %5 = arith.addf %2, %4 : vector<128x128xf32>
    %c0_5 = arith.constant 0 : index
    %6 = memref.load %arg4[%c0_5] : memref<1xf32, #tpu.memory_space<smem>>
    %cst_6 = arith.constant 0.000000e+00 : f32
    %7 = vector.broadcast %cst_6 : f32 to vector<128x128xf32>
    %8 = arith.cmpf oge, %5, %7 : vector<128x128xf32>
    %9 = vector.broadcast %6 : f32 to vector<128x128xf32>
    %10 = arith.mulf %9, %5 : vector<128x128xf32>
    %11 = arith.select %8, %5, %10 : vector<128x128xi1>, vector<128x128xf32>
    %c0_7 = arith.constant 0 : index
    %c0_8 = arith.constant 0 : index
    %12 = vector.load %arg5[%c0_7, %c0_8] : memref<128x128xf32, #tpu.memory_space<vmem>>, vector<128x128xf32>
    %13 = arith.addf %11, %12 : vector<128x128xf32>
    %c0_9 = arith.constant 0 : index
    %c0_10 = arith.constant 0 : index
    %14 = vector.load %arg6[%c0_9, %c0_10] : memref<128x128xf32, #tpu.memory_space<vmem>>, vector<128x128xf32>
    tpu.vector_store %arg6[%c0_9, %c0_10], %13 {strides = array<i32>} : memref<128x128xf32, #tpu.memory_space<vmem>>, vector<128x128xf32>,
    return
  }
  func.func @transform_0(%arg0: i32) -> (i32, i32) {
    %c0_i32 = arith.constant 0 : i32
    %c0_i32_0 = arith.constant 0 : i32
    return %c0_i32, %arg0 : i32, i32
  }
  func.func @transform_1(%arg0: i32) -> (i32, i32) {
    %c0_i32 = arith.constant 0 : i32
    %c0_i32_0 = arith.constant 0 : i32
    %c0_i32_1 = arith.constant 0 : i32
    return %c0_i32, %c0_i32_0 : i32, i32
  }
  func.func @transform_2(%arg0: i32) -> (i32, i32) {
    %c0_i32 = arith.constant 0 : i32
    %c0_i32_0 = arith.constant 0 : i32
    %c0_i32_1 = arith.constant 0 : i32
    return %c0_i32, %c0_i32_0 : i32, i32
  }
  func.func @transform_3(%arg0: i32) -> i32 {
    %c0_i32 = arith.constant 0 : i32
    %c0_i32_0 = arith.constant 0 : i32
    return %c0_i32 : i32
  }
  func.func @transform_4(%arg0: i32) -> (i32, i32) {
    %c0_i32 = arith.constant 0 : i32
    %c0_i32_0 = arith.constant 0 : i32
    return %c0_i32, %arg0 : i32, i32
  }
  func.func @transform_5(%arg0: i32) -> (i32, i32) {
    %c0_i32 = arith.constant 0 : i32
    %c0_i32_0 = arith.constant 0 : i32
    return %c0_i32, %arg0 : i32, i32
  }
}

</mosaic_0001>

<llo_original>
// kernel: feedback_block2.6
$region0: #{feedback_block2.6}
  #allocation0 [shape = 'u32[]', space=smem, size = 0x4, offset = 0x4, fixed_abs, tag = 'smem constant byte address 0x4 - core index']
  #allocation1 [shape = 'u32[72,128]{1,0:T(1,128)}', space=vmem, size = 0x9000, scoped, tag = 'internal scratch']
  #allocation2 [shape = 'f32[1]{0:T(128)S(6)}', space=smem, size = 0x200, scoped, tag = 'scoped memory for feedback_block2.6']
  #allocation3 [shape = 'f32[1]{0:T(128)S(6)}', space=smem, size = 0x200, scoped, tag = 'scoped memory for feedback_block2.6']
  %s0 = inlined_call_operand.vmem [shape: bf16[256,128], index: 0, kind: input, shape index: {}]
  %s1 = inlined_call_operand.vmem [shape: bf16[8,256], index: 1, kind: input, shape index: {}]
  %s2 = inlined_call_operand.vmem [shape: f32[8,1], index: 2, kind: input, shape index: {}]
  %s3 = inlined_call_operand.<no memory space> [shape: f32[1], index: 3, kind: input, shape index: {}]
  %s4 = inlined_call_operand.vmem [shape: bf16[8,8], index: 4, kind: input, shape index: {}]
  %s5 = inlined_call_operand.vmem [shape: f32[8,1], index: 5, kind: input, shape index: {}]
  %s6 = inlined_call_operand.<no memory space> [shape: f32[1], index: 6, kind: input, shape index: {}]
  %s7 = inlined_call_operand.vmem [shape: f32[8,128], index: 7, kind: output, shape index: {}]
  %s8 = sld [smem:[#allocation0]]
  $region38: #{feedback_block2.6} parent=0
    _
  %s10 = ssub.s32 1, %s8
  %s11 = scalar_select 0, %s10, %s8
  %12 = sst [smem:[#allocation2]] %s3
  %13 = sst [smem:[#allocation3]] %s6
  // Predicated region
  $region2: #{feedback_block2.6} parent=0 // pred_check
    _
  $region3: #{feedback_block2.6} parent=0 // pred_check_branch
    %15 = sbr.rel (0) target = $region5
  $region4: #{feedback_block2.6} parent=0 // pred_region
    _
  $region5: #{feedback_block2.6} parent=0 // pred_fallthru
    _
  // Predicated region
  $region6: #{feedback_block2.6} parent=0 // pred_check
    _
  $region7: #{feedback_block2.6} parent=0 // pred_check_branch
    %17 = sbr.rel (0) target = $region9
  $region8: #{feedback_block2.6} parent=0 // pred_region
    _
  $region9: #{feedback_block2.6} parent=0 // pred_fallthru
    _
  // Predicated region
  $region10: #{feedback_block2.6} parent=0 // pred_check
    _
  $region11: #{feedback_block2.6} parent=0 // pred_check_branch
    %19 = sbr.rel (0) target = $region13
  $region12: #{feedback_block2.6} parent=0 // pred_region
    _
  $region13: #{feedback_block2.6} parent=0 // pred_fallthru
    _
  // Predicated region
  $region14: #{feedback_block2.6} parent=0 // pred_check
    _
  $region15: #{feedback_block2.6} parent=0 // pred_check_branch
    %21 = sbr.rel (0) target = $region17
  $region16: #{feedback_block2.6} parent=0 // pred_region
    _
  $region17: #{feedback_block2.6} parent=0 // pred_fallthru
    _
  // Predicated region
  $region18: #{feedback_block2.6} parent=0 // pred_check
    _
  $region19: #{feedback_block2.6} parent=0 // pred_check_branch
    %23 = sbr.rel (0) target = $region21
  $region20: #{feedback_block2.6} parent=0 // pred_region
    _
  $region21: #{feedback_block2.6} parent=0 // pred_fallthru
    _
  // Predicated region
  $region22: #{feedback_block2.6} parent=0 // pred_check
    _
  $region23: #{feedback_block2.6} parent=0 // pred_check_branch
    %25 = sbr.rel (0) target = $region25
  $region24: #{feedback_block2.6} parent=0 // pred_region
    _
  $region25: #{feedback_block2.6} parent=0 // pred_fallthru
    _
  // Predicated region
  $region26: #{feedback_block2.6} parent=0 // pred_check
    _
  $region27: #{feedback_block2.6} parent=0 // pred_check_branch
    %27 = sbr.rel (0) target = $region29
  $region28: #{feedback_block2.6} parent=0 // pred_region
    _
  $region29: #{feedback_block2.6} parent=0 // pred_fallthru
    _
  %v29 = vld [vmem:[%s1] sm:$0xff]
  %v30 = vld [vmem:[%s0] sm:$0xf]
  %v31 = vld [vmem:[%s0 + $0x4] sm:$0xf]
  %v32 = vld [vmem:[%s0 + $0x8] sm:$0xf]
  %v33 = vld [vmem:[%s0 + $0xc] sm:$0xf]
  %v34 = vld [vmem:[%s0 + $0x10] sm:$0xf]
  %v35 = vld [vmem:[%s0 + $0x14] sm:$0xf]
  %v36 = vld [vmem:[%s0 + $0x18] sm:$0xf]
  %v37 = vld [vmem:[%s0 + $0x1c] sm:$0xf]
  %v38 = vld [vmem:[%s0 + $0x20] sm:$0xf]
  %v39 = vld [vmem:[%s0 + $0x24] sm:$0xf]
  %v40 = vld [vmem:[%s0 + $0x28] sm:$0xf]
  %v41 = vld [vmem:[%s0 + $0x2c] sm:$0xf]
  %v42 = vld [vmem:[%s0 + $0x30] sm:$0xf]
  %v43 = vld [vmem:[%s0 + $0x34] sm:$0xf]
  %v44 = vld [vmem:[%s0 + $0x38] sm:$0xf]
  %v45 = vld [vmem:[%s0 + $0x3c] sm:$0xf]
  %v46 = vld [vmem:[%s0 + $0x40] sm:$0xf]
  %v47 = vld [vmem:[%s0 + $0x44] sm:$0xf]
  %v48 = vld [vmem:[%s0 + $0x48] sm:$0xf]
  %v49 = vld [vmem:[%s0 + $0x4c] sm:$0xf]
  %v50 = vld [vmem:[%s0 + $0x50] sm:$0xf]
  %v51 = vld [vmem:[%s0 + $0x54] sm:$0xf]
  %v52 = vld [vmem:[%s0 + $0x58] sm:$0xf]
  %v53 = vld [vmem:[%s0 + $0x5c] sm:$0xf]
  %v54 = vld [vmem:[%s0 + $0x60] sm:$0xf]
  %v55 = vld [vmem:[%s0 + $0x64] sm:$0xf]
  %v56 = vld [vmem:[%s0 + $0x68] sm:$0xf]
  %v57 = vld [vmem:[%s0 + $0x6c] sm:$0xf]
  %v58 = vld [vmem:[%s0 + $0x70] sm:$0xf]
  %v59 = vld [vmem:[%s0 + $0x74] sm:$0xf]
  %v60 = vld [vmem:[%s0 + $0x78] sm:$0xf]
  %v61 = vld [vmem:[%s0 + $0x7c] sm:$0xf]
  %v62 = vld [vmem:[%s2] sm:$0xff]
  %64 = vset.pattern.permute.xlu0 0
  %65 = vperm.xlu0 %64, %v62
  %v66 = vpop.permute.xlu0 %65
  %v69 = vunpack.c.l.b16 %v29
  %v70 = vunpack.c.h.b16 %v29
  %v71 = vpack.c.b16 %v69, %v69
  %v72 = vpack.c.b16 %v70, %v70
  %v107 = vunpack.c.l.b16 %v30
  %v108 = vunpack.c.l.b16 %v31
  %v109 = vunpack.c.l.b16 %v32
  %v110 = vunpack.c.l.b16 %v33
  %v111 = vunpack.c.l.b16 %v34
  %v112 = vunpack.c.l.b16 %v35
  %v113 = vunpack.c.l.b16 %v36
  %v114 = vunpack.c.l.b16 %v37
  %v115 = vunpack.c.l.b16 %v38
  %v116 = vunpack.c.l.b16 %v39
  %v117 = vunpack.c.l.b16 %v40
  %v118 = vunpack.c.l.b16 %v41
  %v119 = vunpack.c.l.b16 %v42
  %v120 = vunpack.c.l.b16 %v43
  %v121 = vunpack.c.l.b16 %v44
  %v122 = vunpack.c.l.b16 %v45
  %v123 = vunpack.c.l.b16 %v46
  %v124 = vunpack.c.l.b16 %v47
  %v125 = vunpack.c.l.b16 %v48
  %v126 = vunpack.c.l.b16 %v49
  %v127 = vunpack.c.l.b16 %v50
  %v128 = vunpack.c.l.b16 %v51
  %v129 = vunpack.c.l.b16 %v52
  %v130 = vunpack.c.l.b16 %v53
  %v131 = vunpack.c.l.b16 %v54
  %v132 = vunpack.c.l.b16 %v55
  %v133 = vunpack.c.l.b16 %v56
  %v134 = vunpack.c.l.b16 %v57
  %v135 = vunpack.c.l.b16 %v58
  %v136 = vunpack.c.l.b16 %v59
  %v137 = vunpack.c.l.b16 %v60
  %v138 = vunpack.c.l.b16 %v61
  %v139 = vpack.c.b16 %v108, %v107
  %v140 = vpack.c.b16 %v110, %v109
  %v141 = vpack.c.b16 %v112, %v111
  %v142 = vpack.c.b16 %v114, %v113
  %v143 = vpack.c.b16 %v116, %v115
  %v144 = vpack.c.b16 %v118, %v117
  %v145 = vpack.c.b16 %v120, %v119
  %v146 = vpack.c.b16 %v122, %v121
  %v147 = vpack.c.b16 %v124, %v123
  %v148 = vpack.c.b16 %v126, %v125
  %v149 = vpack.c.b16 %v128, %v127
  %v150 = vpack.c.b16 %v130, %v129
  %v151 = vpack.c.b16 %v132, %v131
  %v152 = vpack.c.b16 %v134, %v133
  %v153 = vpack.c.b16 %v136, %v135
  %v154 = vpack.c.b16 %v138, %v137
  %171 = vmatpush.bf16.msra.mxu0 %v146
  %172 = vmatpush.bf16.msra.mxu0 %v145
  %173 = vmatpush.bf16.msra.mxu0 %v144
  %174 = vmatpush.bf16.msra.mxu0 %v143
  %175 = vmatpush.bf16.msra.mxu0 %v142
  %176 = vmatpush.bf16.msra.mxu0 %v141
  %177 = vmatpush.bf16.msra.mxu0 %v140
  %178 = vmatpush.bf16.msra.mxu0 %v139
  %179 = vmatmul.bf16.gmra.mxu0 %v71
  %v180 = vpop.f32.mrf.mxu0
  %v181 = vadd.f32 %v66, %v180
  %v182 = vpop.f32.mrf.mxu0
  %183 = vdwg.mxu0
  %184 = vmatpush.bf16.msra.mxu0 %v154
  %185 = vmatpush.bf16.msra.mxu0 %v153
  %186 = vmatpush.bf16.msra.mxu0 %v152
  %187 = vmatpush.bf16.msra.mxu0 %v151
  %188 = vmatpush.bf16.msra.mxu0 %v150
  %189 = vmatpush.bf16.msra.mxu0 %v149
  %190 = vmatpush.bf16.msra.mxu0 %v148
  %191 = vmatpush.bf16.msra.mxu0 %v147
  %192 = vmatmul.bf16.gmra.mxu0 %v72
  %v193 = vpop.f32.mrf.mxu0
  %v194 = vadd.f32 %v181, %v193
  %v195 = vpop.f32.mrf.mxu0
  %196 = vdwg.mxu0
  %s197 = sld [smem:[#allocation2]]
  %vm198 = vcmp.ge.f32.partialorder %v194, 0.0
  %v199 = vstv %s197
  %v200 = vmul.f32 %v199, %v194
  %v201 = vsel %vm198, %v194, %v200
  %v202 = vld [vmem:[%s4] sm:$0xf]
  %v203 = vpack.c.bf16 %v201, %v201
  %v204 = vld [vmem:[%s5] sm:$0xff]
  %206 = vset.pattern.permute.xlu0 0
  %207 = vperm.xlu0 %206, %v204
  %v208 = vpop.permute.xlu0 %207
  %vm210 = vcmask 64512
  %v212 = vsel %vm210, %v202, 0
  %vm214 = vcmask 1043456
  %v216 = vsel %vm214, %v203, 0
  %218 = vmatpush.bf16.msra.mxu0 0
  %219 = vmatpush.bf16.msra.mxu0 0
  %220 = vmatpush.bf16.msra.mxu0 0
  %221 = vmatpush.bf16.msra.mxu0 0
  %222 = vmatpush.bf16.msra.mxu0 0
  %223 = vmatpush.bf16.msra.mxu0 0
  %224 = vmatpush.bf16.msra.mxu0 0
  %225 = vmatpush.bf16.msra.mxu0 %v216
  %226 = vmatmul.bf16.gmra.mxu0 %v212
  %v227 = vpop.f32.mrf.mxu0
  %v228 = vadd.f32 %v208, %v227
  %v229 = vpop.f32.mrf.mxu0
  %230 = vdwg.mxu0
  %s231 = sld [smem:[#allocation3]]
  %vm232 = vcmp.ge.f32.partialorder %v228, 0.0
  %v233 = vstv %s231
  %v234 = vmul.f32 %v233, %v228
  %v235 = vsel %vm232, %v228, %v234
  %236 = vst [vmem:[%s7] sm:$0xff] %v235
  // Predicated region
  $region30: #{feedback_block2.6} parent=0 // pred_check
    _
  $region31: #{feedback_block2.6} parent=0 // pred_check_branch
    %238 = sbr.rel (0) target = $region33
  $region32: #{feedback_block2.6} parent=0 // pred_region
    _
  $region33: #{feedback_block2.6} parent=0 // pred_fallthru
    _
  // Predicated region
  $region34: #{feedback_block2.6} parent=0 // pred_check
    _
  $region35: #{feedback_block2.6} parent=0 // pred_check_branch
    %240 = sbr.rel (0) target = $region37
  $region36: #{feedback_block2.6} parent=0 // pred_region
    _
  $region37: #{feedback_block2.6} parent=0 // pred_fallthru
    _

// kernel: feedback_block2.7
$region0: #{feedback_block2.7}
  #allocation0 [shape = 'u32[]', space=smem, size = 0x4, offset = 0x4, fixed_abs, tag = 'smem constant byte address 0x4 - core index']
  #allocation1 [shape = 'u32[72,128]{1,0:T(1,128)}', space=vmem, size = 0x9000, scoped, tag = 'internal scratch']
  #allocation2 [shape = 'f32[1]{0:T(128)S(6)}', space=smem, size = 0x200, scoped, tag = 'scoped memory for feedback_block2.7']
  %s0 = inlined_call_operand.vmem [shape: bf16[72,128], index: 0, kind: input, shape index: {}]
  %s1 = inlined_call_operand.vmem [shape: bf16[128,72], index: 1, kind: input, shape index: {}]
  %s2 = inlined_call_operand.vmem [shape: f32[128,1], index: 2, kind: input, shape index: {}]
  %s3 = inlined_call_operand.<no memory space> [shape: f32[1], index: 3, kind: input, shape index: {}]
  %s4 = inlined_call_operand.vmem [shape: f32[128,128], index: 4, kind: output, shape index: {}]
  %s5 = sld [smem:[#allocation0]]
  $region26: #{feedback_block2.7} parent=0
    _
  %s7 = ssub.s32 1, %s5
  %s8 = scalar_select 0, %s7, %s5
  %9 = sst [smem:[#allocation2]] %s3
  // Predicated region
  $region2: #{feedback_block2.7} parent=0 // pred_check
    _
  $region3: #{feedback_block2.7} parent=0 // pred_check_branch
    %11 = sbr.rel (0) target = $region5
  $region4: #{feedback_block2.7} parent=0 // pred_region
    _
  $region5: #{feedback_block2.7} parent=0 // pred_fallthru
    _
  // Predicated region
  $region6: #{feedback_block2.7} parent=0 // pred_check
    _
  $region7: #{feedback_block2.7} parent=0 // pred_check_branch
    %13 = sbr.rel (0) target = $region9
  $region8: #{feedback_block2.7} parent=0 // pred_region
    _
  $region9: #{feedback_block2.7} parent=0 // pred_fallthru
    _
  // Predicated region
  $region10: #{feedback_block2.7} parent=0 // pred_check
    _
  $region11: #{feedback_block2.7} parent=0 // pred_check_branch
    %15 = sbr.rel (0) target = $region13
  $region12: #{feedback_block2.7} parent=0 // pred_region
    _
  $region13: #{feedback_block2.7} parent=0 // pred_fallthru
    _
  // Predicated region
  $region14: #{feedback_block2.7} parent=0 // pred_check
    _
  $region15: #{feedback_block2.7} parent=0 // pred_check_branch
    %17 = sbr.rel (0) target = $region17
  $region16: #{feedback_block2.7} parent=0 // pred_region
    _
  $region17: #{feedback_block2.7} parent=0 // pred_fallthru
    _
  %v19 = vld [vmem:[%s1] sm:$0xf]
  %v20 = vld [vmem:[%s1 + $0x4] sm:$0xf]
  %v21 = vld [vmem:[%s1 + $0x8] sm:$0xf]
  %v22 = vld [vmem:[%s1 + $0xc] sm:$0xf]
  %v23 = vld [vmem:[%s1 + $0x10] sm:$0xf]
  %v24 = vld [vmem:[%s1 + $0x14] sm:$0xf]
  %v25 = vld [vmem:[%s1 + $0x18] sm:$0xf]
  %v26 = vld [vmem:[%s1 + $0x1c] sm:$0xf]
  %v27 = vld [vmem:[%s1 + $0x20] sm:$0xf]
  %v28 = vld [vmem:[%s1 + $0x24] sm:$0xf]
  %v29 = vld [vmem:[%s1 + $0x28] sm:$0xf]
  %v30 = vld [vmem:[%s1 + $0x2c] sm:$0xf]
  %v31 = vld [vmem:[%s1 + $0x30] sm:$0xf]
  %v32 = vld [vmem:[%s1 + $0x34] sm:$0xf]
  %v33 = vld [vmem:[%s1 + $0x38] sm:$0xf]
  %v34 = vld [vmem:[%s1 + $0x3c] sm:$0xf]
  %v35 = vld [vmem:[%s0] sm:$0xf]
  %v36 = vld [vmem:[%s0 + $0x4] sm:$0xf]
  %v37 = vld [vmem:[%s0 + $0x8] sm:$0xf]
  %v38 = vld [vmem:[%s0 + $0xc] sm:$0xf]
  %v39 = vld [vmem:[%s0 + $0x10] sm:$0xf]
  %v40 = vld [vmem:[%s0 + $0x14] sm:$0xf]
  %v41 = vld [vmem:[%s0 + $0x18] sm:$0xf]
  %v42 = vld [vmem:[%s0 + $0x1c] sm:$0xf]
  %v43 = vld [vmem:[%s0 + $0x20] sm:$0xf]
  %v44 = vld [vmem:[%s2] sm:$0xff]
  %v45 = vld [vmem:[%s2 + $0x8] sm:$0xff]
  %v46 = vld [vmem:[%s2 + $0x10] sm:$0xff]
  %v47 = vld [vmem:[%s2 + $0x18] sm:$0xff]
  %v48 = vld [vmem:[%s2 + $0x20] sm:$0xff]
  %v49 = vld [vmem:[%s2 + $0x28] sm:$0xff]
  %v50 = vld [vmem:[%s2 + $0x30] sm:$0xff]
  %v51 = vld [vmem:[%s2 + $0x38] sm:$0xff]
  %v52 = vld [vmem:[%s2 + $0x40] sm:$0xff]
  %v53 = vld [vmem:[%s2 + $0x48] sm:$0xff]
  %v54 = vld [vmem:[%s2 + $0x50] sm:$0xff]
  %v55 = vld [vmem:[%s2 + $0x58] sm:$0xff]
  %v56 = vld [vmem:[%s2 + $0x60] sm:$0xff]
  %v57 = vld [vmem:[%s2 + $0x68] sm:$0xff]
  %v58 = vld [vmem:[%s2 + $0x70] sm:$0xff]
  %v59 = vld [vmem:[%s2 + $0x78] sm:$0xff]
  %61 = vset.pattern.permute.xlu0 0
  %62 = vperm.xlu0 %61, %v44
  %v63 = vpop.permute.xlu0 %62
  %66 = vset.pattern.permute.xlu0 0
  %67 = vperm.xlu0 %66, %v45
  %v68 = vpop.permute.xlu0 %67
  %71 = vset.pattern.permute.xlu0 0
  %72 = vperm.xlu0 %71, %v46
  %v73 = vpop.permute.xlu0 %72
  %76 = vset.pattern.permute.xlu0 0
  %77 = vperm.xlu0 %76, %v47
  %v78 = vpop.permute.xlu0 %77
  %81 = vset.pattern.permute.xlu0 0
  %82 = vperm.xlu0 %81, %v48
  %v83 = vpop.permute.xlu0 %82
  %86 = vset.pattern.permute.xlu0 0
  %87 = vperm.xlu0 %86, %v49
  %v88 = vpop.permute.xlu0 %87
  %91 = vset.pattern.permute.xlu0 0
  %92 = vperm.xlu0 %91, %v50
  %v93 = vpop.permute.xlu0 %92
  %96 = vset.pattern.permute.xlu0 0
  %97 = vperm.xlu0 %96, %v51
  %v98 = vpop.permute.xlu0 %97
  %101 = vset.pattern.permute.xlu0 0
  %102 = vperm.xlu0 %101, %v52
  %v103 = vpop.permute.xlu0 %102
  %106 = vset.pattern.permute.xlu0 0
  %107 = vperm.xlu0 %106, %v53
  %v108 = vpop.permute.xlu0 %107
  %111 = vset.pattern.permute.xlu0 0
  %112 = vperm.xlu0 %111, %v54
  %v113 = vpop.permute.xlu0 %112
  %116 = vset.pattern.permute.xlu0 0
  %117 = vperm.xlu0 %116, %v55
  %v118 = vpop.permute.xlu0 %117
  %121 = vset.pattern.permute.xlu0 0
  %122 = vperm.xlu0 %121, %v56
  %v123 = vpop.permute.xlu0 %122
  %126 = vset.pattern.permute.xlu0 0
  %127 = vperm.xlu0 %126, %v57
  %v128 = vpop.permute.xlu0 %127
  %131 = vset.pattern.permute.xlu0 0
  %132 = vperm.xlu0 %131, %v58
  %v133 = vpop.permute.xlu0 %132
  %136 = vset.pattern.permute.xlu0 0
  %137 = vperm.xlu0 %136, %v59
  %v138 = vpop.permute.xlu0 %137
  %v156 = vunpack.c.l.b16 %v19
  %v157 = vunpack.c.l.b16 %v20
  %v158 = vunpack.c.l.b16 %v21
  %v159 = vunpack.c.l.b16 %v22
  %v160 = vunpack.c.l.b16 %v23
  %v161 = vunpack.c.l.b16 %v24
  %v162 = vunpack.c.l.b16 %v25
  %v163 = vunpack.c.l.b16 %v26
  %v164 = vunpack.c.l.b16 %v27
  %v165 = vunpack.c.l.b16 %v28
  %v166 = vunpack.c.l.b16 %v29
  %v167 = vunpack.c.l.b16 %v30
  %v168 = vunpack.c.l.b16 %v31
  %v169 = vunpack.c.l.b16 %v32
  %v170 = vunpack.c.l.b16 %v33
  %v171 = vunpack.c.l.b16 %v34
  %v172 = vpack.c.b16 %v157, %v156
  %v173 = vpack.c.b16 %v159, %v158
  %v174 = vpack.c.b16 %v161, %v160
  %v175 = vpack.c.b16 %v163, %v162
  %v176 = vpack.c.b16 %v165, %v164
  %v177 = vpack.c.b16 %v167, %v166
  %v178 = vpack.c.b16 %v169, %v168
  %v179 = vpack.c.b16 %v171, %v170
  %v189 = vunpack.c.l.b16 %v35
  %v190 = vunpack.c.l.b16 %v36
  %v191 = vunpack.c.l.b16 %v37
  %v192 = vunpack.c.l.b16 %v38
  %v193 = vunpack.c.l.b16 %v39
  %v194 = vunpack.c.l.b16 %v40
  %v195 = vunpack.c.l.b16 %v41
  %v196 = vunpack.c.l.b16 %v42
  %v197 = vunpack.c.l.b16 %v43
  %v198 = vpack.c.b16 %v190, %v189
  %v199 = vpack.c.b16 %v192, %v191
  %v200 = vpack.c.b16 %v194, %v193
  %v201 = vpack.c.b16 %v196, %v195
  %v202 = vpack.c.b16 %v197, %v197
  %vm207 = vcmask 588800
  %v209 = vsel %vm207, %v172, 0
  %v212 = vsel %vm207, %v173, 0
  %v215 = vsel %vm207, %v174, 0
  %v218 = vsel %vm207, %v175, 0
  %v221 = vsel %vm207, %v176, 0
  %v224 = vsel %vm207, %v177, 0
  %v227 = vsel %vm207, %v178, 0
  %v230 = vsel %vm207, %v179, 0
  %vm232 = vcmask 1043456
  %v234 = vsel %vm232, %v202, 0
  %236 = vmatpush.bf16.msra.mxu0 0
  %237 = vmatpush.bf16.msra.mxu0 0
  %238 = vmatpush.bf16.msra.mxu0 0
  %239 = vmatpush.bf16.msra.mxu0 %v234
  %240 = vmatpush.bf16.msra.mxu0 %v201
  %241 = vmatpush.bf16.msra.mxu0 %v200
  %242 = vmatpush.bf16.msra.mxu0 %v199
  %243 = vmatpush.bf16.msra.mxu0 %v198
  %244 = vmatmul.bf16.gmra.mxu0 %v209
  %v245 = vpop.f32.mrf.mxu0
  %v246 = vadd.f32 %v63, %v245
  %v247 = vpop.f32.mrf.mxu0
  %v248 = vadd.f32 %v68, %v247
  %249 = vmatmul.bf16.gmra.mxu0 %v212
  %v250 = vpop.f32.mrf.mxu0
  %v251 = vadd.f32 %v73, %v250
  %v252 = vpop.f32.mrf.mxu0
  %v253 = vadd.f32 %v78, %v252
  %254 = vmatmul.bf16.gmra.mxu0 %v215
  %v255 = vpop.f32.mrf.mxu0
  %v256 = vadd.f32 %v83, %v255
  %v257 = vpop.f32.mrf.mxu0
  %v258 = vadd.f32 %v88, %v257
  %259 = vmatmul.bf16.gmra.mxu0 %v218
  %v260 = vpop.f32.mrf.mxu0
  %v261 = vadd.f32 %v93, %v260
  %v262 = vpop.f32.mrf.mxu0
  %v263 = vadd.f32 %v98, %v262
  %264 = vmatmul.bf16.gmra.mxu0 %v221
  %v265 = vpop.f32.mrf.mxu0
  %v266 = vadd.f32 %v103, %v265
  %v267 = vpop.f32.mrf.mxu0
  %v268 = vadd.f32 %v108, %v267
  %269 = vmatmul.bf16.gmra.mxu0 %v224
  %v270 = vpop.f32.mrf.mxu0
  %v271 = vadd.f32 %v113, %v270
  %v272 = vpop.f32.mrf.mxu0
  %v273 = vadd.f32 %v118, %v272
  %274 = vmatmul.bf16.gmra.mxu0 %v227
  %v275 = vpop.f32.mrf.mxu0
  %v276 = vadd.f32 %v123, %v275
  %v277 = vpop.f32.mrf.mxu0
  %v278 = vadd.f32 %v128, %v277
  %279 = vmatmul.bf16.gmra.mxu0 %v230
  %v280 = vpop.f32.mrf.mxu0
  %v281 = vadd.f32 %v133, %v280
  %v282 = vpop.f32.mrf.mxu0
  %v283 = vadd.f32 %v138, %v282
  %284 = vdwg.mxu0
  %s285 = sld [smem:[#allocation2]]
  %vm286 = vcmp.ge.f32.partialorder %v246, 0.0
  %vm287 = vcmp.ge.f32.partialorder %v248, 0.0
  %vm288 = vcmp.ge.f32.partialorder %v251, 0.0
  %vm289 = vcmp.ge.f32.partialorder %v253, 0.0
  %vm290 = vcmp.ge.f32.partialorder %v256, 0.0
  %vm291 = vcmp.ge.f32.partialorder %v258, 0.0
  %vm292 = vcmp.ge.f32.partialorder %v261, 0.0
  %vm293 = vcmp.ge.f32.partialorder %v263, 0.0
  %vm294 = vcmp.ge.f32.partialorder %v266, 0.0
  %vm295 = vcmp.ge.f32.partialorder %v268, 0.0
  %vm296 = vcmp.ge.f32.partialorder %v271, 0.0
  %vm297 = vcmp.ge.f32.partialorder %v273, 0.0
  %vm298 = vcmp.ge.f32.partialorder %v276, 0.0
  %vm299 = vcmp.ge.f32.partialorder %v278, 0.0
  %vm300 = vcmp.ge.f32.partialorder %v281, 0.0
  %vm301 = vcmp.ge.f32.partialorder %v283, 0.0
  %v302 = vstv %s285
  %v303 = vmul.f32 %v302, %v246
  %v304 = vmul.f32 %v302, %v248
  %v305 = vmul.f32 %v302, %v251
  %v306 = vmul.f32 %v302, %v253
  %v307 = vmul.f32 %v302, %v256
  %v308 = vmul.f32 %v302, %v258
  %v309 = vmul.f32 %v302, %v261
  %v310 = vmul.f32 %v302, %v263
  %v311 = vmul.f32 %v302, %v266
  %v312 = vmul.f32 %v302, %v268
  %v313 = vmul.f32 %v302, %v271
  %v314 = vmul.f32 %v302, %v273
  %v315 = vmul.f32 %v302, %v276
  %v316 = vmul.f32 %v302, %v278
  %v317 = vmul.f32 %v302, %v281
  %v318 = vmul.f32 %v302, %v283
  %v319 = vsel %vm286, %v246, %v303
  %v320 = vsel %vm287, %v248, %v304
  %v321 = vsel %vm288, %v251, %v305
  %v322 = vsel %vm289, %v253, %v306
  %v323 = vsel %vm290, %v256, %v307
  %v324 = vsel %vm291, %v258, %v308
  %v325 = vsel %vm292, %v261, %v309
  %v326 = vsel %vm293, %v263, %v310
  %v327 = vsel %vm294, %v266, %v311
  %v328 = vsel %vm295, %v268, %v312
  %v329 = vsel %vm296, %v271, %v313
  %v330 = vsel %vm297, %v273, %v314
  %v331 = vsel %vm298, %v276, %v315
  %v332 = vsel %vm299, %v278, %v316
  %v333 = vsel %vm300, %v281, %v317
  %v334 = vsel %vm301, %v283, %v318
  %335 = vst [vmem:[%s4] sm:$0xff] %v319
  %336 = vst [vmem:[%s4 + $0x8] sm:$0xff] %v320
  %337 = vst [vmem:[%s4 + $0x10] sm:$0xff] %v321
  %338 = vst [vmem:[%s4 + $0x18] sm:$0xff] %v322
  %339 = vst [vmem:[%s4 + $0x20] sm:$0xff] %v323
  %340 = vst [vmem:[%s4 + $0x28] sm:$0xff] %v324
  %341 = vst [vmem:[%s4 + $0x30] sm:$0xff] %v325
  %342 = vst [vmem:[%s4 + $0x38] sm:$0xff] %v326
  %343 = vst [vmem:[%s4 + $0x40] sm:$0xff] %v327
  %344 = vst [vmem:[%s4 + $0x48] sm:$0xff] %v328
  %345 = vst [vmem:[%s4 + $0x50] sm:$0xff] %v329
  %346 = vst [vmem:[%s4 + $0x58] sm:$0xff] %v330
  %347 = vst [vmem:[%s4 + $0x60] sm:$0xff] %v331
  %348 = vst [vmem:[%s4 + $0x68] sm:$0xff] %v332
  %349 = vst [vmem:[%s4 + $0x70] sm:$0xff] %v333
  %350 = vst [vmem:[%s4 + $0x78] sm:$0xff] %v334
  // Predicated region
  $region18: #{feedback_block2.7} parent=0 // pred_check
    _
  $region19: #{feedback_block2.7} parent=0 // pred_check_branch
    %352 = sbr.rel (0) target = $region21
  $region20: #{feedback_block2.7} parent=0 // pred_region
    _
  $region21: #{feedback_block2.7} parent=0 // pred_fallthru
    _
  // Predicated region
  $region22: #{feedback_block2.7} parent=0 // pred_check
    _
  $region23: #{feedback_block2.7} parent=0 // pred_check_branch
    %354 = sbr.rel (0) target = $region25
  $region24: #{feedback_block2.7} parent=0 // pred_region
    _
  $region25: #{feedback_block2.7} parent=0 // pred_fallthru
    _

// kernel: feedback_block2.8
$region0: #{feedback_block2.8}
  #allocation0 [shape = 'u32[]', space=smem, size = 0x4, offset = 0x4, fixed_abs, tag = 'smem constant byte address 0x4 - core index']
  #allocation1 [shape = 'u32[72,128]{1,0:T(1,128)}', space=vmem, size = 0x9000, scoped, tag = 'internal scratch']
  %s0 = inlined_call_operand.vmem [shape: f32[8,128], index: 0, kind: input, shape index: {}]
  %s1 = inlined_call_operand.vmem [shape: f32[8,128], index: 1, kind: input, shape index: {}]
  %s2 = inlined_call_operand.vmem [shape: f32[8,128], index: 2, kind: output, shape index: {}]
  %s3 = sld [smem:[#allocation0]]
  $region18: #{feedback_block2.8} parent=0
    _
  %s5 = ssub.s32 1, %s3
  %s6 = scalar_select 0, %s5, %s3
  // Predicated region
  $region2: #{feedback_block2.8} parent=0 // pred_check
    _
  $region3: #{feedback_block2.8} parent=0 // pred_check_branch
    %8 = sbr.rel (0) target = $region5
  $region4: #{feedback_block2.8} parent=0 // pred_region
    _
  $region5: #{feedback_block2.8} parent=0 // pred_fallthru
    _
  // Predicated region
  $region6: #{feedback_block2.8} parent=0 // pred_check
    _
  $region7: #{feedback_block2.8} parent=0 // pred_check_branch
    %10 = sbr.rel (0) target = $region9
  $region8: #{feedback_block2.8} parent=0 // pred_region
    _
  $region9: #{feedback_block2.8} parent=0 // pred_fallthru
    _
  %v11 = vld [vmem:[%s0] sm:$0xff]
  %v12 = vld [vmem:[%s1] sm:$0xff]
  %v13 = vsub.f32 %v11, %v12
  %v14 = vmax.f32 %v13, 0.0
  %v15 = vmul.f32 %v14, %v11
  %v16 = vmul.f32 %v15, 0.1
  %v17 = vadd.f32 %v11, %v16
  %18 = vst [vmem:[%s2] sm:$0xff] %v17
  // Predicated region
  $region10: #{feedback_block2.8} parent=0 // pred_check
    _
  $region11: #{feedback_block2.8} parent=0 // pred_check_branch
    %20 = sbr.rel (0) target = $region13
  $region12: #{feedback_block2.8} parent=0 // pred_region
    _
  $region13: #{feedback_block2.8} parent=0 // pred_fallthru
    _
  // Predicated region
  $region14: #{feedback_block2.8} parent=0 // pred_check
    _
  $region15: #{feedback_block2.8} parent=0 // pred_check_branch
    %22 = sbr.rel (0) target = $region17
  $region16: #{feedback_block2.8} parent=0 // pred_region
    _
  $region17: #{feedback_block2.8} parent=0 // pred_fallthru
    _

// kernel: feedback_block2.10
$region0: #{feedback_block2.10}
  #allocation0 [shape = 'u32[]', space=smem, size = 0x4, offset = 0x4, fixed_abs, tag = 'smem constant byte address 0x4 - core index']
  #allocation1 [shape = 'u32[72,128]{1,0:T(1,128)}', space=vmem, size = 0x9000, scoped, tag = 'internal scratch']
  #allocation2 [shape = 'f32[1]{0:T(128)S(6)}', space=smem, size = 0x200, scoped, tag = 'scoped memory for feedback_block2.10']
  %s0 = inlined_call_operand.vmem [shape: bf16[1152,128], index: 0, kind: input, shape index: {}]
  %s1 = inlined_call_operand.vmem [shape: bf16[8,1152], index: 1, kind: input, shape index: {}]
  %s2 = inlined_call_operand.vmem [shape: f32[8,1], index: 2, kind: input, shape index: {}]
  %s3 = inlined_call_operand.<no memory space> [shape: f32[1], index: 3, kind: input, shape index: {}]
  %s4 = inlined_call_operand.vmem [shape: f32[8,128], index: 4, kind: input, shape index: {}]
  %s5 = inlined_call_operand.vmem [shape: bf16[8,128], index: 5, kind: output, shape index: {}]
  %s6 = sld [smem:[#allocation0]]
  $region30: #{feedback_block2.10} parent=0
    _
  %s8 = ssub.s32 1, %s6
  %s9 = scalar_select 0, %s8, %s6
  %10 = sst [smem:[#allocation2]] %s3
  // Predicated region
  $region2: #{feedback_block2.10} parent=0 // pred_check
    _
  $region3: #{feedback_block2.10} parent=0 // pred_check_branch
    %12 = sbr.rel (0) target = $region5
  $region4: #{feedback_block2.10} parent=0 // pred_region
    _
  $region5: #{feedback_block2.10} parent=0 // pred_fallthru
    _
  // Predicated region
  $region6: #{feedback_block2.10} parent=0 // pred_check
    _
  $region7: #{feedback_block2.10} parent=0 // pred_check_branch
    %14 = sbr.rel (0) target = $region9
  $region8: #{feedback_block2.10} parent=0 // pred_region
    _
  $region9: #{feedback_block2.10} parent=0 // pred_fallthru
    _
  // Predicated region
  $region10: #{feedback_block2.10} parent=0 // pred_check
    _
  $region11: #{feedback_block2.10} parent=0 // pred_check_branch
    %16 = sbr.rel (0) target = $region13
  $region12: #{feedback_block2.10} parent=0 // pred_region
    _
  $region13: #{feedback_block2.10} parent=0 // pred_fallthru
    _
  // Predicated region
  $region14: #{feedback_block2.10} parent=0 // pred_check
    _
  $region15: #{feedback_block2.10} parent=0 // pred_check_branch
    %18 = sbr.rel (0) target = $region17
  $region16: #{feedback_block2.10} parent=0 // pred_region
    _
  $region17: #{feedback_block2.10} parent=0 // pred_fallthru
    _
  // Predicated region
  $region18: #{feedback_block2.10} parent=0 // pred_check
    _
  $region19: #{feedback_block2.10} parent=0 // pred_check_branch
    %20 = sbr.rel (0) target = $region21
  $region20: #{feedback_block2.10} parent=0 // pred_region
    _
  $region21: #{feedback_block2.10} parent=0 // pred_fallthru
    _
  %v21 = vld [vmem:[%s1] sm:$0xff]
  %v22 = vld [vmem:[%s1 + $0x8] sm:$0xff]
  %v23 = vld [vmem:[%s1 + $0x10] sm:$0xff]
  %v24 = vld [vmem:[%s1 + $0x18] sm:$0xff]
  %v25 = vld [vmem:[%s1 + $0x20] sm:$0xf]
  %v26 = vld [vmem:[%s0] sm:$0xf]
  %v27 = vld [vmem:[%s0 + $0x4] sm:$0xf]
  %v28 = vld [vmem:[%s0 + $0x8] sm:$0xf]
  %v29 = vld [vmem:[%s0 + $0xc] sm:$0xf]
  %v30 = vld [vmem:[%s0 + $0x10] sm:$0xf]
  %v31 = vld [vmem:[%s0 + $0x14] sm:$0xf]
  %v32 = vld [vmem:[%s0 + $0x18] sm:$0xf]
  %v33 = vld [vmem:[%s0 + $0x1c] sm:$0xf]
  %v34 = vld [vmem:[%s0 + $0x20] sm:$0xf]
  %v35 = vld [vmem:[%s0 + $0x24] sm:$0xf]
  %v36 = vld [vmem:[%s0 + $0x28] sm:$0xf]
  %v37 = vld [vmem:[%s0 + $0x2c] sm:$0xf]
  %v38 = vld [vmem:[%s0 + $0x30] sm:$0xf]
  %v39 = vld [vmem:[%s0 + $0x34] sm:$0xf]
  %v40 = vld [vmem:[%s0 + $0x38] sm:$0xf]
  %v41 = vld [vmem:[%s0 + $0x3c] sm:$0xf]
  %v42 = vld [vmem:[%s0 + $0x40] sm:$0xf]
  %v43 = vld [vmem:[%s0 + $0x44] sm:$0xf]
  %v44 = vld [vmem:[%s0 + $0x48] sm:$0xf]
  %v45 = vld [vmem:[%s0 + $0x4c] sm:$0xf]
  %v46 = vld [vmem:[%s0 + $0x50] sm:$0xf]
  %v47 = vld [vmem:[%s0 + $0x54] sm:$0xf]
  %v48 = vld [vmem:[%s0 + $0x58] sm:$0xf]
  %v49 = vld [vmem:[%s0 + $0x5c] sm:$0xf]
  %v50 = vld [vmem:[%s0 + $0x60] sm:$0xf]
  %v51 = vld [vmem:[%s0 + $0x64] sm:$0xf]
  %v52 = vld [vmem:[%s0 + $0x68] sm:$0xf]
  %v53 = vld [vmem:[%s0 + $0x6c] sm:$0xf]
  %v54 = vld [vmem:[%s0 + $0x70] sm:$0xf]
  %v55 = vld [vmem:[%s0 + $0x74] sm:$0xf]
  %v56 = vld [vmem:[%s0 + $0x78] sm:$0xf]
  %v57 = vld [vmem:[%s0 + $0x7c] sm:$0xf]
  %v58 = vld [vmem:[%s0 + $0x80] sm:$0xf]
  %v59 = vld [vmem:[%s0 + $0x84] sm:$0xf]
  %v60 = vld [vmem:[%s0 + $0x88] sm:$0xf]
  %v61 = vld [vmem:[%s0 + $0x8c] sm:$0xf]
  %v62 = vld [vmem:[%s0 + $0x90] sm:$0xf]
  %v63 = vld [vmem:[%s0 + $0x94] sm:$0xf]
  %v64 = vld [vmem:[%s0 + $0x98] sm:$0xf]
  %v65 = vld [vmem:[%s0 + $0x9c] sm:$0xf]
  %v66 = vld [vmem:[%s0 + $0xa0] sm:$0xf]
  %v67 = vld [vmem:[%s0 + $0xa4] sm:$0xf]
  %v68 = vld [vmem:[%s0 + $0xa8] sm:$0xf]
  %v69 = vld [vmem:[%s0 + $0xac] sm:$0xf]
  %v70 = vld [vmem:[%s0 + $0xb0] sm:$0xf]
  %v71 = vld [vmem:[%s0 + $0xb4] sm:$0xf]
  %v72 = vld [vmem:[%s0 + $0xb8] sm:$0xf]
  %v73 = vld [vmem:[%s0 + $0xbc] sm:$0xf]
  %v74 = vld [vmem:[%s0 + $0xc0] sm:$0xf]
  %v75 = vld [vmem:[%s0 + $0xc4] sm:$0xf]
  %v76 = vld [vmem:[%s0 + $0xc8] sm:$0xf]
  %v77 = vld [vmem:[%s0 + $0xcc] sm:$0xf]
  %v78 = vld [vmem:[%s0 + $0xd0] sm:$0xf]
  %v79 = vld [vmem:[%s0 + $0xd4] sm:$0xf]
  %v80 = vld [vmem:[%s0 + $0xd8] sm:$0xf]
  %v81 = vld [vmem:[%s0 + $0xdc] sm:$0xf]
  %v82 = vld [vmem:[%s0 + $0xe0] sm:$0xf]
  %v83 = vld [vmem:[%s0 + $0xe4] sm:$0xf]
  %v84 = vld [vmem:[%s0 + $0xe8] sm:$0xf]
  %v85 = vld [vmem:[%s0 + $0xec] sm:$0xf]
  %v86 = vld [vmem:[%s0 + $0xf0] sm:$0xf]
  %v87 = vld [vmem:[%s0 + $0xf4] sm:$0xf]
  %v88 = vld [vmem:[%s0 + $0xf8] sm:$0xf]
  %v89 = vld [vmem:[%s0 + $0xfc] sm:$0xf]
  %v90 = vld [vmem:[%s0 + $0x100] sm:$0xf]
  %v91 = vld [vmem:[%s0 + $0x104] sm:$0xf]
  %v92 = vld [vmem:[%s0 + $0x108] sm:$0xf]
  %v93 = vld [vmem:[%s0 + $0x10c] sm:$0xf]
  %v94 = vld [vmem:[%s0 + $0x110] sm:$0xf]
  %v95 = vld [vmem:[%s0 + $0x114] sm:$0xf]
  %v96 = vld [vmem:[%s0 + $0x118] sm:$0xf]
  %v97 = vld [vmem:[%s0 + $0x11c] sm:$0xf]
  %v98 = vld [vmem:[%s0 + $0x120] sm:$0xf]
  %v99 = vld [vmem:[%s0 + $0x124] sm:$0xf]
  %v100 = vld [vmem:[%s0 + $0x128] sm:$0xf]
  %v101 = vld [vmem:[%s0 + $0x12c] sm:$0xf]
  %v102 = vld [vmem:[%s0 + $0x130] sm:$0xf]
  %v103 = vld [vmem:[%s0 + $0x134] sm:$0xf]
  %v104 = vld [vmem:[%s0 + $0x138] sm:$0xf]
  %v105 = vld [vmem:[%s0 + $0x13c] sm:$0xf]
  %v106 = vld [vmem:[%s0 + $0x140] sm:$0xf]
  %v107 = vld [vmem:[%s0 + $0x144] sm:$0xf]
  %v108 = vld [vmem:[%s0 + $0x148] sm:$0xf]
  %v109 = vld [vmem:[%s0 + $0x14c] sm:$0xf]
  %v110 = vld [vmem:[%s0 + $0x150] sm:$0xf]
  %v111 = vld [vmem:[%s0 + $0x154] sm:$0xf]
  %v112 = vld [vmem:[%s0 + $0x158] sm:$0xf]
  %v113 = vld [vmem:[%s0 + $0x15c] sm:$0xf]
  %v114 = vld [vmem:[%s0 + $0x160] sm:$0xf]
  %v115 = vld [vmem:[%s0 + $0x164] sm:$0xf]
  %v116 = vld [vmem:[%s0 + $0x168] sm:$0xf]
  %v117 = vld [vmem:[%s0 + $0x16c] sm:$0xf]
  %v118 = vld [vmem:[%s0 + $0x170] sm:$0xf]
  %v119 = vld [vmem:[%s0 + $0x174] sm:$0xf]
  %v120 = vld [vmem:[%s0 + $0x178] sm:$0xf]
  %v121 = vld [vmem:[%s0 + $0x17c] sm:$0xf]
  %v122 = vld [vmem:[%s0 + $0x180] sm:$0xf]
  %v123 = vld [vmem:[%s0 + $0x184] sm:$0xf]
  %v124 = vld [vmem:[%s0 + $0x188] sm:$0xf]
  %v125 = vld [vmem:[%s0 + $0x18c] sm:$0xf]
  %v126 = vld [vmem:[%s0 + $0x190] sm:$0xf]
  %v127 = vld [vmem:[%s0 + $0x194] sm:$0xf]
  %v128 = vld [vmem:[%s0 + $0x198] sm:$0xf]
  %v129 = vld [vmem:[%s0 + $0x19c] sm:$0xf]
  %v130 = vld [vmem:[%s0 + $0x1a0] sm:$0xf]
  %v131 = vld [vmem:[%s0 + $0x1a4] sm:$0xf]
  %v132 = vld [vmem:[%s0 + $0x1a8] sm:$0xf]
  %v133 = vld [vmem:[%s0 + $0x1ac] sm:$0xf]
  %v134 = vld [vmem:[%s0 + $0x1b0] sm:$0xf]
  %v135 = vld [vmem:[%s0 + $0x1b4] sm:$0xf]
  %v136 = vld [vmem:[%s0 + $0x1b8] sm:$0xf]
  %v137 = vld [vmem:[%s0 + $0x1bc] sm:$0xf]
  %v138 = vld [vmem:[%s0 + $0x1c0] sm:$0xf]
  %v139 = vld [vmem:[%s0 + $0x1c4] sm:$0xf]
  %v140 = vld [vmem:[%s0 + $0x1c8] sm:$0xf]
  %v141 = vld [vmem:[%s0 + $0x1cc] sm:$0xf]
  %v142 = vld [vmem:[%s0 + $0x1d0] sm:$0xf]
  %v143 = vld [vmem:[%s0 + $0x1d4] sm:$0xf]
  %v144 = vld [vmem:[%s0 + $0x1d8] sm:$0xf]
  %v145 = vld [vmem:[%s0 + $0x1dc] sm:$0xf]
  %v146 = vld [vmem:[%s0 + $0x1e0] sm:$0xf]
  %v147 = vld [vmem:[%s0 + $0x1e4] sm:$0xf]
  %v148 = vld [vmem:[%s0 + $0x1e8] sm:$0xf]
  %v149 = vld [vmem:[%s0 + $0x1ec] sm:$0xf]
  %v150 = vld [vmem:[%s0 + $0x1f0] sm:$0xf]
  %v151 = vld [vmem:[%s0 + $0x1f4] sm:$0xf]
  %v152 = vld [vmem:[%s0 + $0x1f8] sm:$0xf]
  %v153 = vld [vmem:[%s0 + $0x1fc] sm:$0xf]
  %v154 = vld [vmem:[%s0 + $0x200] sm:$0xf]
  %v155 = vld [vmem:[%s0 + $0x204] sm:$0xf]
  %v156 = vld [vmem:[%s0 + $0x208] sm:$0xf]
  %v157 = vld [vmem:[%s0 + $0x20c] sm:$0xf]
  %v158 = vld [vmem:[%s0 + $0x210] sm:$0xf]
  %v159 = vld [vmem:[%s0 + $0x214] sm:$0xf]
  %v160 = vld [vmem:[%s0 + $0x218] sm:$0xf]
  %v161 = vld [vmem:[%s0 + $0x21c] sm:$0xf]
  %v162 = vld [vmem:[%s0 + $0x220] sm:$0xf]
  %v163 = vld [vmem:[%s0 + $0x224] sm:$0xf]
  %v164 = vld [vmem:[%s0 + $0x228] sm:$0xf]
  %v165 = vld [vmem:[%s0 + $0x22c] sm:$0xf]
  %v166 = vld [vmem:[%s0 + $0x230] sm:$0xf]
  %v167 = vld [vmem:[%s0 + $0x234] sm:$0xf]
  %v168 = vld [vmem:[%s0 + $0x238] sm:$0xf]
  %v169 = vld [vmem:[%s0 + $0x23c] sm:$0xf]
  %v170 = vld [vmem:[%s2] sm:$0xff]
  %172 = vset.pattern.permute.xlu0 0
  %173 = vperm.xlu0 %172, %v170
  %v174 = vpop.permute.xlu0 %173
  %v181 = vunpack.c.l.b16 %v21
  %v182 = vunpack.c.h.b16 %v21
  %v183 = vunpack.c.l.b16 %v22
  %v184 = vunpack.c.h.b16 %v22
  %v185 = vunpack.c.l.b16 %v23
  %v186 = vunpack.c.h.b16 %v23
  %v187 = vunpack.c.l.b16 %v24
  %v188 = vunpack.c.h.b16 %v24
  %v189 = vunpack.c.l.b16 %v25
  %v190 = vpack.c.b16 %v181, %v181
  %v191 = vpack.c.b16 %v182, %v182
  %v192 = vpack.c.b16 %v183, %v183
  %v193 = vpack.c.b16 %v184, %v184
  %v194 = vpack.c.b16 %v185, %v185
  %v195 = vpack.c.b16 %v186, %v186
  %v196 = vpack.c.b16 %v187, %v187
  %v197 = vpack.c.b16 %v188, %v188
  %v198 = vpack.c.b16 %v189, %v189
  %v352 = vunpack.c.l.b16 %v26
  %v353 = vunpack.c.l.b16 %v27
  %v354 = vunpack.c.l.b16 %v28
  %v355 = vunpack.c.l.b16 %v29
  %v356 = vunpack.c.l.b16 %v30
  %v357 = vunpack.c.l.b16 %v31
  %v358 = vunpack.c.l.b16 %v32
  %v359 = vunpack.c.l.b16 %v33
  %v360 = vunpack.c.l.b16 %v34
  %v361 = vunpack.c.l.b16 %v35
  %v362 = vunpack.c.l.b16 %v36
  %v363 = vunpack.c.l.b16 %v37
  %v364 = vunpack.c.l.b16 %v38
  %v365 = vunpack.c.l.b16 %v39
  %v366 = vunpack.c.l.b16 %v40
  %v367 = vunpack.c.l.b16 %v41
  %v368 = vunpack.c.l.b16 %v42
  %v369 = vunpack.c.l.b16 %v43
  %v370 = vunpack.c.l.b16 %v44
  %v371 = vunpack.c.l.b16 %v45
  %v372 = vunpack.c.l.b16 %v46
  %v373 = vunpack.c.l.b16 %v47
  %v374 = vunpack.c.l.b16 %v48
  %v375 = vunpack.c.l.b16 %v49
  %v376 = vunpack.c.l.b16 %v50
  %v377 = vunpack.c.l.b16 %v51
  %v378 = vunpack.c.l.b16 %v52
  %v379 = vunpack.c.l.b16 %v53
  %v380 = vunpack.c.l.b16 %v54
  %v381 = vunpack.c.l.b16 %v55
  %v382 = vunpack.c.l.b16 %v56
  %v383 = vunpack.c.l.b16 %v57
  %v384 = vunpack.c.l.b16 %v58
  %v385 = vunpack.c.l.b16 %v59
  %v386 = vunpack.c.l.b16 %v60
  %v387 = vunpack.c.l.b16 %v61
  %v388 = vunpack.c.l.b16 %v62
  %v389 = vunpack.c.l.b16 %v63
  %v390 = vunpack.c.l.b16 %v64
  %v391 = vunpack.c.l.b16 %v65
  %v392 = vunpack.c.l.b16 %v66
  %v393 = vunpack.c.l.b16 %v67
  %v394 = vunpack.c.l.b16 %v68
  %v395 = vunpack.c.l.b16 %v69
  %v396 = vunpack.c.l.b16 %v70
  %v397 = vunpack.c.l.b16 %v71
  %v398 = vunpack.c.l.b16 %v72
  %v399 = vunpack.c.l.b16 %v73
  %v400 = vunpack.c.l.b16 %v74
  %v401 = vunpack.c.l.b16 %v75
  %v402 = vunpack.c.l.b16 %v76
  %v403 = vunpack.c.l.b16 %v77
  %v404 = vunpack.c.l.b16 %v78
  %v405 = vunpack.c.l.b16 %v79
  %v406 = vunpack.c.l.b16 %v80
  %v407 = vunpack.c.l.b16 %v81
  %v408 = vunpack.c.l.b16 %v82
  %v409 = vunpack.c.l.b16 %v83
  %v410 = vunpack.c.l.b16 %v84
  %v411 = vunpack.c.l.b16 %v85
  %v412 = vunpack.c.l.b16 %v86
  %v413 = vunpack.c.l.b16 %v87
  %v414 = vunpack.c.l.b16 %v88
  %v415 = vunpack.c.l.b16 %v89
  %v416 = vunpack.c.l.b16 %v90
  %v417 = vunpack.c.l.b16 %v91
  %v418 = vunpack.c.l.b16 %v92
  %v419 = vunpack.c.l.b16 %v93
  %v420 = vunpack.c.l.b16 %v94
  %v421 = vunpack.c.l.b16 %v95
  %v422 = vunpack.c.l.b16 %v96
  %v423 = vunpack.c.l.b16 %v97
  %v424 = vunpack.c.l.b16 %v98
  %v425 = vunpack.c.l.b16 %v99
  %v426 = vunpack.c.l.b16 %v100
  %v427 = vunpack.c.l.b16 %v101
  %v428 = vunpack.c.l.b16 %v102
  %v429 = vunpack.c.l.b16 %v103
  %v430 = vunpack.c.l.b16 %v104
  %v431 = vunpack.c.l.b16 %v105
  %v432 = vunpack.c.l.b16 %v106
  %v433 = vunpack.c.l.b16 %v107
  %v434 = vunpack.c.l.b16 %v108
  %v435 = vunpack.c.l.b16 %v109
  %v436 = vunpack.c.l.b16 %v110
  %v437 = vunpack.c.l.b16 %v111
  %v438 = vunpack.c.l.b16 %v112
  %v439 = vunpack.c.l.b16 %v113
  %v440 = vunpack.c.l.b16 %v114
  %v441 = vunpack.c.l.b16 %v115
  %v442 = vunpack.c.l.b16 %v116
  %v443 = vunpack.c.l.b16 %v117
  %v444 = vunpack.c.l.b16 %v118
  %v445 = vunpack.c.l.b16 %v119
  %v446 = vunpack.c.l.b16 %v120
  %v447 = vunpack.c.l.b16 %v121
  %v448 = vunpack.c.l.b16 %v122
  %v449 = vunpack.c.l.b16 %v123
  %v450 = vunpack.c.l.b16 %v124
  %v451 = vunpack.c.l.b16 %v125
  %v452 = vunpack.c.l.b16 %v126
  %v453 = vunpack.c.l.b16 %v127
  %v454 = vunpack.c.l.b16 %v128
  %v455 = vunpack.c.l.b16 %v129
  %v456 = vunpack.c.l.b16 %v130
  %v457 = vunpack.c.l.b16 %v131
  %v458 = vunpack.c.l.b16 %v132
  %v459 = vunpack.c.l.b16 %v133
  %v460 = vunpack.c.l.b16 %v134
  %v461 = vunpack.c.l.b16 %v135
  %v462 = vunpack.c.l.b16 %v136
  %v463 = vunpack.c.l.b16 %v137
  %v464 = vunpack.c.l.b16 %v138
  %v465 = vunpack.c.l.b16 %v139
  %v466 = vunpack.c.l.b16 %v140
  %v467 = vunpack.c.l.b16 %v141
  %v468 = vunpack.c.l.b16 %v142
  %v469 = vunpack.c.l.b16 %v143
  %v470 = vunpack.c.l.b16 %v144
  %v471 = vunpack.c.l.b16 %v145
  %v472 = vunpack.c.l.b16 %v146
  %v473 = vunpack.c.l.b16 %v147
  %v474 = vunpack.c.l.b16 %v148
  %v475 = vunpack.c.l.b16 %v149
  %v476 = vunpack.c.l.b16 %v150
  %v477 = vunpack.c.l.b16 %v151
  %v478 = vunpack.c.l.b16 %v152
  %v479 = vunpack.c.l.b16 %v153
  %v480 = vunpack.c.l.b16 %v154
  %v481 = vunpack.c.l.b16 %v155
  %v482 = vunpack.c.l.b16 %v156
  %v483 = vunpack.c.l.b16 %v157
  %v484 = vunpack.c.l.b16 %v158
  %v485 = vunpack.c.l.b16 %v159
  %v486 = vunpack.c.l.b16 %v160
  %v487 = vunpack.c.l.b16 %v161
  %v488 = vunpack.c.l.b16 %v162
  %v489 = vunpack.c.l.b16 %v163
  %v490 = vunpack.c.l.b16 %v164
  %v491 = vunpack.c.l.b16 %v165
  %v492 = vunpack.c.l.b16 %v166
  %v493 = vunpack.c.l.b16 %v167
  %v494 = vunpack.c.l.b16 %v168
  %v495 = vunpack.c.l.b16 %v169
  %v496 = vpack.c.b16 %v353, %v352
  %v497 = vpack.c.b16 %v355, %v354
  %v498 = vpack.c.b16 %v357, %v356
  %v499 = vpack.c.b16 %v359, %v358
  %v500 = vpack.c.b16 %v361, %v360
  %v501 = vpack.c.b16 %v363, %v362
  %v502 = vpack.c.b16 %v365, %v364
  %v503 = vpack.c.b16 %v367, %v366
  %v504 = vpack.c.b16 %v369, %v368
  %v505 = vpack.c.b16 %v371, %v370
  %v506 = vpack.c.b16 %v373, %v372
  %v507 = vpack.c.b16 %v375, %v374
  %v508 = vpack.c.b16 %v377, %v376
  %v509 = vpack.c.b16 %v379, %v378
  %v510 = vpack.c.b16 %v381, %v380
  %v511 = vpack.c.b16 %v383, %v382
  %v512 = vpack.c.b16 %v385, %v384
  %v513 = vpack.c.b16 %v387, %v386
  %v514 = vpack.c.b16 %v389, %v388
  %v515 = vpack.c.b16 %v391, %v390
  %v516 = vpack.c.b16 %v393, %v392
  %v517 = vpack.c.b16 %v395, %v394
  %v518 = vpack.c.b16 %v397, %v396
  %v519 = vpack.c.b16 %v399, %v398
  %v520 = vpack.c.b16 %v401, %v400
  %v521 = vpack.c.b16 %v403, %v402
  %v522 = vpack.c.b16 %v405, %v404
  %v523 = vpack.c.b16 %v407, %v406
  %v524 = vpack.c.b16 %v409, %v408
  %v525 = vpack.c.b16 %v411, %v410
  %v526 = vpack.c.b16 %v413, %v412
  %v527 = vpack.c.b16 %v415, %v414
  %v528 = vpack.c.b16 %v417, %v416
  %v529 = vpack.c.b16 %v419, %v418
  %v530 = vpack.c.b16 %v421, %v420
  %v531 = vpack.c.b16 %v423, %v422
  %v532 = vpack.c.b16 %v425, %v424
  %v533 = vpack.c.b16 %v427, %v426
  %v534 = vpack.c.b16 %v429, %v428
  %v535 = vpack.c.b16 %v431, %v430
  %v536 = vpack.c.b16 %v433, %v432
  %v537 = vpack.c.b16 %v435, %v434
  %v538 = vpack.c.b16 %v437, %v436
  %v539 = vpack.c.b16 %v439, %v438
  %v540 = vpack.c.b16 %v441, %v440
  %v541 = vpack.c.b16 %v443, %v442
  %v542 = vpack.c.b16 %v445, %v444
  %v543 = vpack.c.b16 %v447, %v446
  %v544 = vpack.c.b16 %v449, %v448
  %v545 = vpack.c.b16 %v451, %v450
  %v546 = vpack.c.b16 %v453, %v452
  %v547 = vpack.c.b16 %v455, %v454
  %v548 = vpack.c.b16 %v457, %v456
  %v549 = vpack.c.b16 %v459, %v458
  %v550 = vpack.c.b16 %v461, %v460
  %v551 = vpack.c.b16 %v463, %v462
  %v552 = vpack.c.b16 %v465, %v464
  %v553 = vpack.c.b16 %v467, %v466
  %v554 = vpack.c.b16 %v469, %v468
  %v555 = vpack.c.b16 %v471, %v470
  %v556 = vpack.c.b16 %v473, %v472
  %v557 = vpack.c.b16 %v475, %v474
  %v558 = vpack.c.b16 %v477, %v476
  %v559 = vpack.c.b16 %v479, %v478
  %v560 = vpack.c.b16 %v481, %v480
  %v561 = vpack.c.b16 %v483, %v482
  %v562 = vpack.c.b16 %v485, %v484
  %v563 = vpack.c.b16 %v487, %v486
  %v564 = vpack.c.b16 %v489, %v488
  %v565 = vpack.c.b16 %v491, %v490
  %v566 = vpack.c.b16 %v493, %v492
  %v567 = vpack.c.b16 %v495, %v494
  %640 = vmatpush.bf16.msra.mxu0 %v503
  %641 = vmatpush.bf16.msra.mxu0 %v502
  %642 = vmatpush.bf16.msra.mxu0 %v501
  %643 = vmatpush.bf16.msra.mxu0 %v500
  %644 = vmatpush.bf16.msra.mxu0 %v499
  %645 = vmatpush.bf16.msra.mxu0 %v498
  %646 = vmatpush.bf16.msra.mxu0 %v497
  %647 = vmatpush.bf16.msra.mxu0 %v496
  %648 = vmatmul.bf16.gmra.mxu0 %v190
  %v649 = vpop.f32.mrf.mxu0
  %v650 = vadd.f32 %v174, %v649
  %v651 = vpop.f32.mrf.mxu0
  %652 = vdwg.mxu0
  %653 = vmatpush.bf16.msra.mxu0 %v511
  %654 = vmatpush.bf16.msra.mxu0 %v510
  %655 = vmatpush.bf16.msra.mxu0 %v509
  %656 = vmatpush.bf16.msra.mxu0 %v508
  %657 = vmatpush.bf16.msra.mxu0 %v507
  %658 = vmatpush.bf16.msra.mxu0 %v506
  %659 = vmatpush.bf16.msra.mxu0 %v505
  %660 = vmatpush.bf16.msra.mxu0 %v504
  %661 = vmatmul.bf16.gmra.mxu0 %v191
  %v662 = vpop.f32.mrf.mxu0
  %v663 = vadd.f32 %v650, %v662
  %v664 = vpop.f32.mrf.mxu0
  %665 = vdwg.mxu0
  %666 = vmatpush.bf16.msra.mxu0 %v519
  %667 = vmatpush.bf16.msra.mxu0 %v518
  %668 = vmatpush.bf16.msra.mxu0 %v517
  %669 = vmatpush.bf16.msra.mxu0 %v516
  %670 = vmatpush.bf16.msra.mxu0 %v515
  %671 = vmatpush.bf16.msra.mxu0 %v514
  %672 = vmatpush.bf16.msra.mxu0 %v513
  %673 = vmatpush.bf16.msra.mxu0 %v512
  %674 = vmatmul.bf16.gmra.mxu0 %v192
  %v675 = vpop.f32.mrf.mxu0
  %v676 = vadd.f32 %v663, %v675
  %v677 = vpop.f32.mrf.mxu0
  %678 = vdwg.mxu0
  %679 = vmatpush.bf16.msra.mxu0 %v527
  %680 = vmatpush.bf16.msra.mxu0 %v526
  %681 = vmatpush.bf16.msra.mxu0 %v525
  %682 = vmatpush.bf16.msra.mxu0 %v524
  %683 = vmatpush.bf16.msra.mxu0 %v523
  %684 = vmatpush.bf16.msra.mxu0 %v522
  %685 = vmatpush.bf16.msra.mxu0 %v521
  %686 = vmatpush.bf16.msra.mxu0 %v520
  %687 = vmatmul.bf16.gmra.mxu0 %v193
  %v688 = vpop.f32.mrf.mxu0
  %v689 = vadd.f32 %v676, %v688
  %v690 = vpop.f32.mrf.mxu0
  %691 = vdwg.mxu0
  %692 = vmatpush.bf16.msra.mxu0 %v535
  %693 = vmatpush.bf16.msra.mxu0 %v534
  %694 = vmatpush.bf16.msra.mxu0 %v533
  %695 = vmatpush.bf16.msra.mxu0 %v532
  %696 = vmatpush.bf16.msra.mxu0 %v531
  %697 = vmatpush.bf16.msra.mxu0 %v530
  %698 = vmatpush.bf16.msra.mxu0 %v529
  %699 = vmatpush.bf16.msra.mxu0 %v528
  %700 = vmatmul.bf16.gmra.mxu0 %v194
  %v701 = vpop.f32.mrf.mxu0
  %v702 = vadd.f32 %v689, %v701
  %v703 = vpop.f32.mrf.mxu0
  %704 = vdwg.mxu0
  %705 = vmatpush.bf16.msra.mxu0 %v543
  %706 = vmatpush.bf16.msra.mxu0 %v542
  %707 = vmatpush.bf16.msra.mxu0 %v541
  %708 = vmatpush.bf16.msra.mxu0 %v540
  %709 = vmatpush.bf16.msra.mxu0 %v539
  %710 = vmatpush.bf16.msra.mxu0 %v538
  %711 = vmatpush.bf16.msra.mxu0 %v537
  %712 = vmatpush.bf16.msra.mxu0 %v536
  %713 = vmatmul.bf16.gmra.mxu0 %v195
  %v714 = vpop.f32.mrf.mxu0
  %v715 = vadd.f32 %v702, %v714
  %v716 = vpop.f32.mrf.mxu0
  %717 = vdwg.mxu0
  %718 = vmatpush.bf16.msra.mxu0 %v551
  %719 = vmatpush.bf16.msra.mxu0 %v550
  %720 = vmatpush.bf16.msra.mxu0 %v549
  %721 = vmatpush.bf16.msra.mxu0 %v548
  %722 = vmatpush.bf16.msra.mxu0 %v547
  %723 = vmatpush.bf16.msra.mxu0 %v546
  %724 = vmatpush.bf16.msra.mxu0 %v545
  %725 = vmatpush.bf16.msra.mxu0 %v544
  %726 = vmatmul.bf16.gmra.mxu0 %v196
  %v727 = vpop.f32.mrf.mxu0
  %v728 = vadd.f32 %v715, %v727
  %v729 = vpop.f32.mrf.mxu0
  %730 = vdwg.mxu0
  %731 = vmatpush.bf16.msra.mxu0 %v559
  %732 = vmatpush.bf16.msra.mxu0 %v558
  %733 = vmatpush.bf16.msra.mxu0 %v557
  %734 = vmatpush.bf16.msra.mxu0 %v556
  %735 = vmatpush.bf16.msra.mxu0 %v555
  %736 = vmatpush.bf16.msra.mxu0 %v554
  %737 = vmatpush.bf16.msra.mxu0 %v553
  %738 = vmatpush.bf16.msra.mxu0 %v552
  %739 = vmatmul.bf16.gmra.mxu0 %v197
  %v740 = vpop.f32.mrf.mxu0
  %v741 = vadd.f32 %v728, %v740
  %v742 = vpop.f32.mrf.mxu0
  %743 = vdwg.mxu0
  %744 = vmatpush.bf16.msra.mxu0 %v567
  %745 = vmatpush.bf16.msra.mxu0 %v566
  %746 = vmatpush.bf16.msra.mxu0 %v565
  %747 = vmatpush.bf16.msra.mxu0 %v564
  %748 = vmatpush.bf16.msra.mxu0 %v563
  %749 = vmatpush.bf16.msra.mxu0 %v562
  %750 = vmatpush.bf16.msra.mxu0 %v561
  %751 = vmatpush.bf16.msra.mxu0 %v560
  %752 = vmatmul.bf16.gmra.mxu0 %v198
  %v753 = vpop.f32.mrf.mxu0
  %v754 = vadd.f32 %v741, %v753
  %v755 = vpop.f32.mrf.mxu0
  %756 = vdwg.mxu0
  %s757 = sld [smem:[#allocation2]]
  %vm758 = vcmp.ge.f32.partialorder %v754, 0.0
  %v759 = vstv %s757
  %v760 = vmul.f32 %v759, %v754
  %v761 = vsel %vm758, %v754, %v760
  %v762 = vld [vmem:[%s4] sm:$0xff]
  %v763 = vsub.f32 %v761, %v762
  %v764 = vpack.c.bf16 %v763, %v763
  %765 = vst [vmem:[%s5] sm:$0xf] %v764
  // Predicated region
  $region22: #{feedback_block2.10} parent=0 // pred_check
    _
  $region23: #{feedback_block2.10} parent=0 // pred_check_branch
    %767 = sbr.rel (0) target = $region25
  $region24: #{feedback_block2.10} parent=0 // pred_region
    _
  $region25: #{feedback_block2.10} parent=0 // pred_fallthru
    _
  // Predicated region
  $region26: #{feedback_block2.10} parent=0 // pred_check
    _
  $region27: #{feedback_block2.10} parent=0 // pred_check_branch
    %769 = sbr.rel (0) target = $region29
  $region28: #{feedback_block2.10} parent=0 // pred_region
    _
  $region29: #{feedback_block2.10} parent=0 // pred_fallthru
    _

// kernel: feedback_block2.11
$region0: #{feedback_block2.11}
  #allocation0 [shape = 'u32[]', space=smem, size = 0x4, offset = 0x4, fixed_abs, tag = 'smem constant byte address 0x4 - core index']
  #allocation1 [shape = 'u32[72,128]{1,0:T(1,128)}', space=vmem, size = 0x9000, scoped, tag = 'internal scratch']
  #allocation2 [shape = 'f32[1]{0:T(128)S(6)}', space=smem, size = 0x200, scoped, tag = 'scoped memory for feedback_block2.11']
  %s0 = inlined_call_operand.vmem [shape: bf16[72,128], index: 0, kind: input, shape index: {}]
  %s1 = inlined_call_operand.vmem [shape: bf16[128,72], index: 1, kind: input, shape index: {}]
  %s2 = inlined_call_operand.vmem [shape: f32[128,1], index: 2, kind: input, shape index: {}]
  %s3 = inlined_call_operand.<no memory space> [shape: f32[1], index: 3, kind: input, shape index: {}]
  %s4 = inlined_call_operand.vmem [shape: f32[128,128], index: 4, kind: input, shape index: {}]
  %s5 = inlined_call_operand.vmem [shape: f32[128,128], index: 5, kind: output, shape index: {}]
  %s6 = sld [smem:[#allocation0]]
  $region30: #{feedback_block2.11} parent=0
    _
  %s8 = ssub.s32 1, %s6
  %s9 = scalar_select 0, %s8, %s6
  %10 = sst [smem:[#allocation2]] %s3
  // Predicated region
  $region2: #{feedback_block2.11} parent=0 // pred_check
    _
  $region3: #{feedback_block2.11} parent=0 // pred_check_branch
    %12 = sbr.rel (0) target = $region5
  $region4: #{feedback_block2.11} parent=0 // pred_region
    _
  $region5: #{feedback_block2.11} parent=0 // pred_fallthru
    _
  // Predicated region
  $region6: #{feedback_block2.11} parent=0 // pred_check
    _
  $region7: #{feedback_block2.11} parent=0 // pred_check_branch
    %14 = sbr.rel (0) target = $region9
  $region8: #{feedback_block2.11} parent=0 // pred_region
    _
  $region9: #{feedback_block2.11} parent=0 // pred_fallthru
    _
  // Predicated region
  $region10: #{feedback_block2.11} parent=0 // pred_check
    _
  $region11: #{feedback_block2.11} parent=0 // pred_check_branch
    %16 = sbr.rel (0) target = $region13
  $region12: #{feedback_block2.11} parent=0 // pred_region
    _
  $region13: #{feedback_block2.11} parent=0 // pred_fallthru
    _
  // Predicated region
  $region14: #{feedback_block2.11} parent=0 // pred_check
    _
  $region15: #{feedback_block2.11} parent=0 // pred_check_branch
    %18 = sbr.rel (0) target = $region17
  $region16: #{feedback_block2.11} parent=0 // pred_region
    _
  $region17: #{feedback_block2.11} parent=0 // pred_fallthru
    _
  // Predicated region
  $region18: #{feedback_block2.11} parent=0 // pred_check
    _
  $region19: #{feedback_block2.11} parent=0 // pred_check_branch
    %20 = sbr.rel (0) target = $region21
  $region20: #{feedback_block2.11} parent=0 // pred_region
    _
  $region21: #{feedback_block2.11} parent=0 // pred_fallthru
    _
  %v22 = vld [vmem:[%s1] sm:$0xf]
  %v23 = vld [vmem:[%s1 + $0x4] sm:$0xf]
  %v24 = vld [vmem:[%s1 + $0x8] sm:$0xf]
  %v25 = vld [vmem:[%s1 + $0xc] sm:$0xf]
  %v26 = vld [vmem:[%s1 + $0x10] sm:$0xf]
  %v27 = vld [vmem:[%s1 + $0x14] sm:$0xf]
  %v28 = vld [vmem:[%s1 + $0x18] sm:$0xf]
  %v29 = vld [vmem:[%s1 + $0x1c] sm:$0xf]
  %v30 = vld [vmem:[%s1 + $0x20] sm:$0xf]
  %v31 = vld [vmem:[%s1 + $0x24] sm:$0xf]
  %v32 = vld [vmem:[%s1 + $0x28] sm:$0xf]
  %v33 = vld [vmem:[%s1 + $0x2c] sm:$0xf]
  %v34 = vld [vmem:[%s1 + $0x30] sm:$0xf]
  %v35 = vld [vmem:[%s1 + $0x34] sm:$0xf]
  %v36 = vld [vmem:[%s1 + $0x38] sm:$0xf]
  %v37 = vld [vmem:[%s1 + $0x3c] sm:$0xf]
  %v38 = vld [vmem:[%s0] sm:$0xf]
  %v39 = vld [vmem:[%s0 + $0x4] sm:$0xf]
  %v40 = vld [vmem:[%s0 + $0x8] sm:$0xf]
  %v41 = vld [vmem:[%s0 + $0xc] sm:$0xf]
  %v42 = vld [vmem:[%s0 + $0x10] sm:$0xf]
  %v43 = vld [vmem:[%s0 + $0x14] sm:$0xf]
  %v44 = vld [vmem:[%s0 + $0x18] sm:$0xf]
  %v45 = vld [vmem:[%s0 + $0x1c] sm:$0xf]
  %v46 = vld [vmem:[%s0 + $0x20] sm:$0xf]
  %v47 = vld [vmem:[%s2] sm:$0xff]
  %v48 = vld [vmem:[%s2 + $0x8] sm:$0xff]
  %v49 = vld [vmem:[%s2 + $0x10] sm:$0xff]
  %v50 = vld [vmem:[%s2 + $0x18] sm:$0xff]
  %v51 = vld [vmem:[%s2 + $0x20] sm:$0xff]
  %v52 = vld [vmem:[%s2 + $0x28] sm:$0xff]
  %v53 = vld [vmem:[%s2 + $0x30] sm:$0xff]
  %v54 = vld [vmem:[%s2 + $0x38] sm:$0xff]
  %v55 = vld [vmem:[%s2 + $0x40] sm:$0xff]
  %v56 = vld [vmem:[%s2 + $0x48] sm:$0xff]
  %v57 = vld [vmem:[%s2 + $0x50] sm:$0xff]
  %v58 = vld [vmem:[%s2 + $0x58] sm:$0xff]
  %v59 = vld [vmem:[%s2 + $0x60] sm:$0xff]
  %v60 = vld [vmem:[%s2 + $0x68] sm:$0xff]
  %v61 = vld [vmem:[%s2 + $0x70] sm:$0xff]
  %v62 = vld [vmem:[%s2 + $0x78] sm:$0xff]
  %64 = vset.pattern.permute.xlu0 0
  %65 = vperm.xlu0 %64, %v47
  %v66 = vpop.permute.xlu0 %65
  %69 = vset.pattern.permute.xlu0 0
  %70 = vperm.xlu0 %69, %v48
  %v71 = vpop.permute.xlu0 %70
  %74 = vset.pattern.permute.xlu0 0
  %75 = vperm.xlu0 %74, %v49
  %v76 = vpop.permute.xlu0 %75
  %79 = vset.pattern.permute.xlu0 0
  %80 = vperm.xlu0 %79, %v50
  %v81 = vpop.permute.xlu0 %80
  %84 = vset.pattern.permute.xlu0 0
  %85 = vperm.xlu0 %84, %v51
  %v86 = vpop.permute.xlu0 %85
  %89 = vset.pattern.permute.xlu0 0
  %90 = vperm.xlu0 %89, %v52
  %v91 = vpop.permute.xlu0 %90
  %94 = vset.pattern.permute.xlu0 0
  %95 = vperm.xlu0 %94, %v53
  %v96 = vpop.permute.xlu0 %95
  %99 = vset.pattern.permute.xlu0 0
  %100 = vperm.xlu0 %99, %v54
  %v101 = vpop.permute.xlu0 %100
  %104 = vset.pattern.permute.xlu0 0
  %105 = vperm.xlu0 %104, %v55
  %v106 = vpop.permute.xlu0 %105
  %109 = vset.pattern.permute.xlu0 0
  %110 = vperm.xlu0 %109, %v56
  %v111 = vpop.permute.xlu0 %110
  %114 = vset.pattern.permute.xlu0 0
  %115 = vperm.xlu0 %114, %v57
  %v116 = vpop.permute.xlu0 %115
  %119 = vset.pattern.permute.xlu0 0
  %120 = vperm.xlu0 %119, %v58
  %v121 = vpop.permute.xlu0 %120
  %124 = vset.pattern.permute.xlu0 0
  %125 = vperm.xlu0 %124, %v59
  %v126 = vpop.permute.xlu0 %125
  %129 = vset.pattern.permute.xlu0 0
  %130 = vperm.xlu0 %129, %v60
  %v131 = vpop.permute.xlu0 %130
  %134 = vset.pattern.permute.xlu0 0
  %135 = vperm.xlu0 %134, %v61
  %v136 = vpop.permute.xlu0 %135
  %139 = vset.pattern.permute.xlu0 0
  %140 = vperm.xlu0 %139, %v62
  %v141 = vpop.permute.xlu0 %140
  %v159 = vunpack.c.l.b16 %v22
  %v160 = vunpack.c.l.b16 %v23
  %v161 = vunpack.c.l.b16 %v24
  %v162 = vunpack.c.l.b16 %v25
  %v163 = vunpack.c.l.b16 %v26
  %v164 = vunpack.c.l.b16 %v27
  %v165 = vunpack.c.l.b16 %v28
  %v166 = vunpack.c.l.b16 %v29
  %v167 = vunpack.c.l.b16 %v30
  %v168 = vunpack.c.l.b16 %v31
  %v169 = vunpack.c.l.b16 %v32
  %v170 = vunpack.c.l.b16 %v33
  %v171 = vunpack.c.l.b16 %v34
  %v172 = vunpack.c.l.b16 %v35
  %v173 = vunpack.c.l.b16 %v36
  %v174 = vunpack.c.l.b16 %v37
  %v175 = vpack.c.b16 %v160, %v159
  %v176 = vpack.c.b16 %v162, %v161
  %v177 = vpack.c.b16 %v164, %v163
  %v178 = vpack.c.b16 %v166, %v165
  %v179 = vpack.c.b16 %v168, %v167
  %v180 = vpack.c.b16 %v170, %v169
  %v181 = vpack.c.b16 %v172, %v171
  %v182 = vpack.c.b16 %v174, %v173
  %v192 = vunpack.c.l.b16 %v38
  %v193 = vunpack.c.l.b16 %v39
  %v194 = vunpack.c.l.b16 %v40
  %v195 = vunpack.c.l.b16 %v41
  %v196 = vunpack.c.l.b16 %v42
  %v197 = vunpack.c.l.b16 %v43
  %v198 = vunpack.c.l.b16 %v44
  %v199 = vunpack.c.l.b16 %v45
  %v200 = vunpack.c.l.b16 %v46
  %v201 = vpack.c.b16 %v193, %v192
  %v202 = vpack.c.b16 %v195, %v194
  %v203 = vpack.c.b16 %v197, %v196
  %v204 = vpack.c.b16 %v199, %v198
  %v205 = vpack.c.b16 %v200, %v200
  %vm210 = vcmask 588800
  %v212 = vsel %vm210, %v175, 0
  %v215 = vsel %vm210, %v176, 0
  %v218 = vsel %vm210, %v177, 0
  %v221 = vsel %vm210, %v178, 0
  %v224 = vsel %vm210, %v179, 0
  %v227 = vsel %vm210, %v180, 0
  %v230 = vsel %vm210, %v181, 0
  %v233 = vsel %vm210, %v182, 0
  %vm235 = vcmask 1043456
  %v237 = vsel %vm235, %v205, 0
  %239 = vmatpush.bf16.msra.mxu0 0
  %240 = vmatpush.bf16.msra.mxu0 0
  %241 = vmatpush.bf16.msra.mxu0 0
  %242 = vmatpush.bf16.msra.mxu0 %v237
  %243 = vmatpush.bf16.msra.mxu0 %v204
  %244 = vmatpush.bf16.msra.mxu0 %v203
  %245 = vmatpush.bf16.msra.mxu0 %v202
  %246 = vmatpush.bf16.msra.mxu0 %v201
  %247 = vmatmul.bf16.gmra.mxu0 %v212
  %v248 = vpop.f32.mrf.mxu0
  %v249 = vadd.f32 %v66, %v248
  %v250 = vpop.f32.mrf.mxu0
  %v251 = vadd.f32 %v71, %v250
  %252 = vmatmul.bf16.gmra.mxu0 %v215
  %v253 = vpop.f32.mrf.mxu0
  %v254 = vadd.f32 %v76, %v253
  %v255 = vpop.f32.mrf.mxu0
  %v256 = vadd.f32 %v81, %v255
  %257 = vmatmul.bf16.gmra.mxu0 %v218
  %v258 = vpop.f32.mrf.mxu0
  %v259 = vadd.f32 %v86, %v258
  %v260 = vpop.f32.mrf.mxu0
  %v261 = vadd.f32 %v91, %v260
  %262 = vmatmul.bf16.gmra.mxu0 %v221
  %v263 = vpop.f32.mrf.mxu0
  %v264 = vadd.f32 %v96, %v263
  %v265 = vpop.f32.mrf.mxu0
  %v266 = vadd.f32 %v101, %v265
  %267 = vmatmul.bf16.gmra.mxu0 %v224
  %v268 = vpop.f32.mrf.mxu0
  %v269 = vadd.f32 %v106, %v268
  %v270 = vpop.f32.mrf.mxu0
  %v271 = vadd.f32 %v111, %v270
  %272 = vmatmul.bf16.gmra.mxu0 %v227
  %v273 = vpop.f32.mrf.mxu0
  %v274 = vadd.f32 %v116, %v273
  %v275 = vpop.f32.mrf.mxu0
  %v276 = vadd.f32 %v121, %v275
  %277 = vmatmul.bf16.gmra.mxu0 %v230
  %v278 = vpop.f32.mrf.mxu0
  %v279 = vadd.f32 %v126, %v278
  %v280 = vpop.f32.mrf.mxu0
  %v281 = vadd.f32 %v131, %v280
  %282 = vmatmul.bf16.gmra.mxu0 %v233
  %v283 = vpop.f32.mrf.mxu0
  %v284 = vadd.f32 %v136, %v283
  %v285 = vpop.f32.mrf.mxu0
  %v286 = vadd.f32 %v141, %v285
  %287 = vdwg.mxu0
  %s288 = sld [smem:[#allocation2]]
  %vm289 = vcmp.ge.f32.partialorder %v249, 0.0
  %vm290 = vcmp.ge.f32.partialorder %v251, 0.0
  %vm291 = vcmp.ge.f32.partialorder %v254, 0.0
  %vm292 = vcmp.ge.f32.partialorder %v256, 0.0
  %vm293 = vcmp.ge.f32.partialorder %v259, 0.0
  %vm294 = vcmp.ge.f32.partialorder %v261, 0.0
  %vm295 = vcmp.ge.f32.partialorder %v264, 0.0
  %vm296 = vcmp.ge.f32.partialorder %v266, 0.0
  %vm297 = vcmp.ge.f32.partialorder %v269, 0.0
  %vm298 = vcmp.ge.f32.partialorder %v271, 0.0
  %vm299 = vcmp.ge.f32.partialorder %v274, 0.0
  %vm300 = vcmp.ge.f32.partialorder %v276, 0.0
  %vm301 = vcmp.ge.f32.partialorder %v279, 0.0
  %vm302 = vcmp.ge.f32.partialorder %v281, 0.0
  %vm303 = vcmp.ge.f32.partialorder %v284, 0.0
  %vm304 = vcmp.ge.f32.partialorder %v286, 0.0
  %v305 = vstv %s288
  %v306 = vmul.f32 %v305, %v249
  %v307 = vmul.f32 %v305, %v251
  %v308 = vmul.f32 %v305, %v254
  %v309 = vmul.f32 %v305, %v256
  %v310 = vmul.f32 %v305, %v259
  %v311 = vmul.f32 %v305, %v261
  %v312 = vmul.f32 %v305, %v264
  %v313 = vmul.f32 %v305, %v266
  %v314 = vmul.f32 %v305, %v269
  %v315 = vmul.f32 %v305, %v271
  %v316 = vmul.f32 %v305, %v274
  %v317 = vmul.f32 %v305, %v276
  %v318 = vmul.f32 %v305, %v279
  %v319 = vmul.f32 %v305, %v281
  %v320 = vmul.f32 %v305, %v284
  %v321 = vmul.f32 %v305, %v286
  %v322 = vsel %vm289, %v249, %v306
  %v323 = vsel %vm290, %v251, %v307
  %v324 = vsel %vm291, %v254, %v308
  %v325 = vsel %vm292, %v256, %v309
  %v326 = vsel %vm293, %v259, %v310
  %v327 = vsel %vm294, %v261, %v311
  %v328 = vsel %vm295, %v264, %v312
  %v329 = vsel %vm296, %v266, %v313
  %v330 = vsel %vm297, %v269, %v314
  %v331 = vsel %vm298, %v271, %v315
  %v332 = vsel %vm299, %v274, %v316
  %v333 = vsel %vm300, %v276, %v317
  %v334 = vsel %vm301, %v279, %v318
  %v335 = vsel %vm302, %v281, %v319
  %v336 = vsel %vm303, %v284, %v320
  %v337 = vsel %vm304, %v286, %v321
  %v338 = vld [vmem:[%s4] sm:$0xff]
  %v339 = vld [vmem:[%s4 + $0x8] sm:$0xff]
  %v340 = vld [vmem:[%s4 + $0x10] sm:$0xff]
  %v341 = vld [vmem:[%s4 + $0x18] sm:$0xff]
  %v342 = vld [vmem:[%s4 + $0x20] sm:$0xff]
  %v343 = vld [vmem:[%s4 + $0x28] sm:$0xff]
  %v344 = vld [vmem:[%s4 + $0x30] sm:$0xff]
  %v345 = vld [vmem:[%s4 + $0x38] sm:$0xff]
  %v346 = vld [vmem:[%s4 + $0x40] sm:$0xff]
  %v347 = vld [vmem:[%s4 + $0x48] sm:$0xff]
  %v348 = vld [vmem:[%s4 + $0x50] sm:$0xff]
  %v349 = vld [vmem:[%s4 + $0x58] sm:$0xff]
  %v350 = vld [vmem:[%s4 + $0x60] sm:$0xff]
  %v351 = vld [vmem:[%s4 + $0x68] sm:$0xff]
  %v352 = vld [vmem:[%s4 + $0x70] sm:$0xff]
  %v353 = vld [vmem:[%s4 + $0x78] sm:$0xff]
  %v354 = vadd.f32 %v322, %v338
  %v355 = vadd.f32 %v323, %v339
  %v356 = vadd.f32 %v324, %v340
  %v357 = vadd.f32 %v325, %v341
  %v358 = vadd.f32 %v326, %v342
  %v359 = vadd.f32 %v327, %v343
  %v360 = vadd.f32 %v328, %v344
  %v361 = vadd.f32 %v329, %v345
  %v362 = vadd.f32 %v330, %v346
  %v363 = vadd.f32 %v331, %v347
  %v364 = vadd.f32 %v332, %v348
  %v365 = vadd.f32 %v333, %v349
  %v366 = vadd.f32 %v334, %v350
  %v367 = vadd.f32 %v335, %v351
  %v368 = vadd.f32 %v336, %v352
  %v369 = vadd.f32 %v337, %v353
  %370 = vst [vmem:[%s5] sm:$0xff] %v354
  %371 = vst [vmem:[%s5 + $0x8] sm:$0xff] %v355
  %372 = vst [vmem:[%s5 + $0x10] sm:$0xff] %v356
  %373 = vst [vmem:[%s5 + $0x18] sm:$0xff] %v357
  %374 = vst [vmem:[%s5 + $0x20] sm:$0xff] %v358
  %375 = vst [vmem:[%s5 + $0x28] sm:$0xff] %v359
  %376 = vst [vmem:[%s5 + $0x30] sm:$0xff] %v360
  %377 = vst [vmem:[%s5 + $0x38] sm:$0xff] %v361
  %378 = vst [vmem:[%s5 + $0x40] sm:$0xff] %v362
  %379 = vst [vmem:[%s5 + $0x48] sm:$0xff] %v363
  %380 = vst [vmem:[%s5 + $0x50] sm:$0xff] %v364
  %381 = vst [vmem:[%s5 + $0x58] sm:$0xff] %v365
  %382 = vst [vmem:[%s5 + $0x60] sm:$0xff] %v366
  %383 = vst [vmem:[%s5 + $0x68] sm:$0xff] %v367
  %384 = vst [vmem:[%s5 + $0x70] sm:$0xff] %v368
  %385 = vst [vmem:[%s5 + $0x78] sm:$0xff] %v369
  // Predicated region
  $region22: #{feedback_block2.11} parent=0 // pred_check
    _
  $region23: #{feedback_block2.11} parent=0 // pred_check_branch
    %387 = sbr.rel (0) target = $region25
  $region24: #{feedback_block2.11} parent=0 // pred_region
    _
  $region25: #{feedback_block2.11} parent=0 // pred_fallthru
    _
  // Predicated region
  $region26: #{feedback_block2.11} parent=0 // pred_check
    _
  $region27: #{feedback_block2.11} parent=0 // pred_check_branch
    %389 = sbr.rel (0) target = $region29
  $region28: #{feedback_block2.11} parent=0 // pred_region
    _
  $region29: #{feedback_block2.11} parent=0 // pred_fallthru
    _

</llo_original>
